<compile_context>
chip_gen: v5e
topology: v5e:2x2
jax: 0.10.0
libtpu: 0.0.40
codegen_flags: <defaults>
</compile_context>

<pallas_src>
from functools import partial

import jax
import jax.numpy as jnp
import numpy as np
from jax.experimental import pallas as pl
from jax.experimental.pallas import tpu as pltpu


def _layernorm(x, gamma, beta, eps=1e-5):
    mu = jnp.mean(x, axis=-1, keepdims=True)
    var = jnp.mean((x - mu) ** 2, axis=-1, keepdims=True)
    return (x - mu) * jax.lax.rsqrt(var + eps) * gamma + beta


def transformer_stack_kernel(num_heads, head_dim,
                             x_ref, mask_ref,
                             wqkv_ref, bqkv_ref, wo_ref, bo_ref,
                             g1_ref, be1_ref, w1_ref, b1_ref,
                             w2_ref, b2_ref, g2_ref, be2_ref,
                             out_ref, act_ref):
    layer = pl.program_id(1)
    Bt, S, D = act_ref.shape
    H, dh = num_heads, head_dim
    scale = dh ** (-0.5)

    # First layer of each batch tile: load activation into the resident scratch.
    @pl.when(layer == 0)
    def _():
        act_ref[...] = x_ref[...].astype(jnp.float32)

    x3 = act_ref[...]                      # (Bt, S, D)
    x2 = x3.reshape(Bt * S, D)             # fold batch into the matmul M dim
    mask = mask_ref[...]                   # (S, S) additive mask, broadcast over batch

    # ---- multi-head attention: one fused QKV matmul, per-head static slices ----
    qkv = jnp.dot(x2, wqkv_ref[0], preferred_element_type=jnp.float32) + bqkv_ref[0]
    qkv3 = qkv.reshape(Bt, S, 3 * H * dh)
    wo = wo_ref[0]                         # (H*dh, D)

    attn_out = jnp.zeros((Bt * S, D), jnp.float32)
    for h in range(H):                     # static loop; H is small
        q = qkv3[:, :, h * dh:(h + 1) * dh]
        k = qkv3[:, :, (H + h) * dh:(H + h + 1) * dh]
        v = qkv3[:, :, (2 * H + h) * dh:(2 * H + h + 1) * dh]
        # contract last dims directly — no k.T transpose materialized
        s = jnp.einsum("bqd,bkd->bqk", q, k,
                       preferred_element_type=jnp.float32) * scale + mask
        s = s - jnp.max(s, axis=-1, keepdims=True)
        p = jnp.exp(s)
        p = p * pl.reciprocal(jnp.sum(p, axis=-1, keepdims=True), approx=True)
        ho = jnp.einsum("bqk,bkd->bqd", p, v,
                        preferred_element_type=jnp.float32)      # (Bt, S, dh)
        # accumulate through this head's rows of W_o (no lane concatenate)
        attn_out = attn_out + jnp.dot(ho.reshape(Bt * S, dh),
                                      wo[h * dh:(h + 1) * dh, :],
                                      preferred_element_type=jnp.float32)
    attn_out = attn_out + bo_ref[0]

    # ---- residual + LayerNorm (dropout == identity in eval) ----
    y = _layernorm(x2 + attn_out, g1_ref[0], be1_ref[0])

    # ---- feedforward: Linear -> ReLU -> Linear, residual + LayerNorm ----
    h1 = jnp.maximum(
        jnp.dot(y, w1_ref[0], preferred_element_type=jnp.float32) + b1_ref[0], 0.0)
    ff = jnp.dot(h1, w2_ref[0], preferred_element_type=jnp.float32) + b2_ref[0]
    z3 = _layernorm(y + ff, g2_ref[0], be2_ref[0]).reshape(Bt, S, D)

    act_ref[...] = z3                       # carry activation to the next layer
    out_ref[...] = z3.astype(out_ref.dtype)


def transformer_forward(x, mask, packed, *, num_heads, head_dim, block_b=None):
    B, S, D = x.shape
    L = packed["wqkv"].shape[0]
    H, dh = num_heads, head_dim

    # Batch tile: fold as many sequences as possible into the matmul M dim
    # (target ~256 rows) while exactly dividing B.
    if block_b is None:
        block_b = max(1, min(B, 256 // max(S, 1)))
        while B % block_b:
            block_b -= 1
    grid_b = B // block_b

    def wspec(arr):
        nd = arr.ndim
        # per-layer weight slab, indexed by the (trailing) layer grid axis
        return pl.BlockSpec((1,) + arr.shape[1:],
                            lambda b, l, _nd=nd: (l,) + (0,) * (_nd - 1))

    kernel = partial(transformer_stack_kernel, H, dh)
    grid_spec = pltpu.PrefetchScalarGridSpec(
        num_scalar_prefetch=0,
        grid=(grid_b, L),
        in_specs=[
            pl.BlockSpec((block_b, S, D), lambda b, l: (b, 0, 0)),   # x
            pl.BlockSpec((S, S), lambda b, l: (0, 0)),               # mask
            wspec(packed["wqkv"]), wspec(packed["bqkv"]),
            wspec(packed["wo"]), wspec(packed["bo"]),
            wspec(packed["g1"]), wspec(packed["be1"]),
            wspec(packed["w1"]), wspec(packed["b1"]),
            wspec(packed["w2"]), wspec(packed["b2"]),
            wspec(packed["g2"]), wspec(packed["be2"]),
        ],
        out_specs=pl.BlockSpec((block_b, S, D), lambda b, l: (b, 0, 0)),
        scratch_shapes=[pltpu.VMEM((block_b, S, D), jnp.float32)],
    )
    return pl.pallas_call(
        kernel,
        out_shape=jax.ShapeDtypeStruct((B, S, D), x.dtype),
        grid_spec=grid_spec,
        compiler_params=pltpu.CompilerParams(
            dimension_semantics=("parallel", "arbitrary")),
    )(x, mask,
      packed["wqkv"], packed["bqkv"], packed["wo"], packed["bo"],
      packed["g1"], packed["be1"], packed["w1"], packed["b1"],
      packed["w2"], packed["b2"], packed["g2"], packed["be2"])


# ------------------------- parameter packing for the kernel ------------------
def pack_params(params):
    """Stack per-layer params along a leading layer axis and fuse Q/K/V."""
    def fuse_qkv(p):
        H = p["wq"].shape[0]
        cat = lambda w: jnp.concatenate([w[h] for h in range(H)], axis=-1)
        wqkv = jnp.concatenate([cat(p["wq"]), cat(p["wk"]), cat(p["wv"])], axis=-1)
        bqkv = jnp.concatenate([cat(p["bq"]), cat(p["bk"]), cat(p["bv"])], axis=-1)
        return wqkv, bqkv

    wqkv, bqkv = zip(*(fuse_qkv(p) for p in params))
    stack = lambda name: jnp.stack([p[name] for p in params], axis=0)
    return dict(
        wqkv=jnp.stack(wqkv, 0), bqkv=jnp.stack(bqkv, 0),
        wo=stack("wo"), bo=stack("bo"),
        g1=stack("g1"), be1=stack("be1"),
        w1=stack("w1"), b1=stack("b1"),
        w2=stack("w2"), b2=stack("b2"),
        g2=stack("g2"), be2=stack("be2"),
    )


# ------------------------- pure-JAX reference (for sanity check) -------------
def ref_layer(x, mask, p):
    H, _, dh = p["wq"].shape
    scale = dh ** (-0.5)
    outs = []
    for h in range(H):
        q = x @ p["wq"][h] + p["bq"][h]
        k = x @ p["wk"][h] + p["bk"][h]
        v = x @ p["wv"][h] + p["bv"][h]
        attn = jnp.einsum("bqd,bkd->bqk", q, k) * scale + mask
        attn = jax.nn.softmax(attn, axis=-1)
        outs.append(jnp.einsum("bqk,bkd->bqd", attn, v))
    ho = jnp.concatenate(outs, axis=-1)
    attn_out = ho @ p["wo"] + p["bo"]
    y = _layernorm(x + attn_out, p["g1"], p["be1"])
    h1 = jnp.maximum(y @ p["w1"] + p["b1"], 0.0)
    ff = h1 @ p["w2"] + p["b2"]
    return _layernorm(y + ff, p["g2"], p["be2"])


def ref_forward(x, mask, params):
    for p in params:
        x = ref_layer(x, mask, p)
    return x


# ------------------------- deterministic parameter init ----------------------
def init_params(key, num_layers, d_model, num_heads, head_dim, ff_dim):
    params = []
    for layer in range(num_layers):
        ks = jax.random.split(jax.random.fold_in(key, layer), 12)

        def w(k, shape):
            return jax.random.normal(k, shape, jnp.float32) * 0.05

        params.append(dict(
            wq=w(ks[0], (num_heads, d_model, head_dim)),
            bq=w(ks[1], (num_heads, 1, head_dim)),
            wk=w(ks[2], (num_heads, d_model, head_dim)),
            bk=w(ks[3], (num_heads, 1, head_dim)),
            wv=w(ks[4], (num_heads, d_model, head_dim)),
            bv=w(ks[5], (num_heads, 1, head_dim)),
            wo=w(ks[6], (num_heads * head_dim, d_model)),
            bo=w(ks[7], (1, d_model)),
            g1=jnp.ones((1, d_model), jnp.float32),
            be1=jnp.zeros((1, d_model), jnp.float32),
            w1=w(ks[8], (d_model, ff_dim)),
            b1=w(ks[9], (1, ff_dim)),
            w2=w(ks[10], (ff_dim, d_model)),
            b2=w(ks[11], (1, d_model)),
            g2=jnp.ones((1, d_model), jnp.float32),
            be2=jnp.zeros((1, d_model), jnp.float32),
        ))
    return params


if __name__ == "__main__":
    B, S, D = 2, 8, 32
    num_layers, num_heads, head_dim, ff_dim = 2, 2, 16, 64

    key = jax.random.PRNGKey(0)
    kx, kp = jax.random.split(key)
    x = jax.random.normal(kx, (B, S, D), jnp.float32)

    # additive causal mask, shape (S, S), broadcast over batch (matches attn += mask)
    mask = jnp.where(jnp.tril(jnp.ones((S, S), jnp.bool_)), 0.0, -1e9).astype(jnp.float32)

    params = init_params(kp, num_layers, D, num_heads, head_dim, ff_dim)
    packed = pack_params(params)

    out = transformer_forward(x, mask, packed,
                              num_heads=num_heads, head_dim=head_dim)
    out = jax.block_until_ready(out)

    ref = jax.block_until_ready(ref_forward(x, mask, params))
    np.testing.assert_allclose(np.asarray(out), np.asarray(ref), rtol=2e-2, atol=2e-2)

    print("KERNEL_OK")
</pallas_src>

<mosaic_0001>
module attributes {stable_mosaic.version = 11 : i64} {
  func.func @transformer_stack_kernel(%arg0: i32, %arg1: i32, %arg2: memref<2x8x32xf32, #tpu.memory_space<vmem>>, %arg3: memref<8x8xf32, #tpu.memory_space<vmem>>, %arg4: memref<1x32x96xf32, #tpu.memory_space<vmem>>, %arg5: memref<1x1x96xf32, #tpu.memory_space<vmem>>, %arg6: memref<1x32x32xf32, #tpu.memory_space<vmem>>, %arg7: memref<1x1x32xf32, #tpu.memory_space<vmem>>, %arg8: memref<1x1x32xf32, #tpu.memory_space<vmem>>, %arg9: memref<1x1x32xf32, #tpu.memory_space<vmem>>, %arg10: memref<1x32x64xf32, #tpu.memory_space<vmem>>, %arg11: memref<1x1x64xf32, #tpu.memory_space<vmem>>, %arg12: memref<1x64x32xf32, #tpu.memory_space<vmem>>, %arg13: memref<1x1x32xf32, #tpu.memory_space<vmem>>, %arg14: memref<1x1x32xf32, #tpu.memory_space<vmem>>, %arg15: memref<1x1x32xf32, #tpu.memory_space<vmem>>, %arg16: memref<2x8x32xf32, #tpu.memory_space<vmem>>, %arg17: memref<2x8x32xf32, #tpu.memory_space<vmem>>) attributes {dimension_semantics = [#tpu.dimension_semantics<parallel>, #tpu.dimension_semantics<arbitrary>], iteration_bounds = array<i64: 1, 2>, scalar_prefetch = 0 : i64, scratch_operands = 1 : i64, tpu.core_type = #tpu.core_type<tc>, window_params = [{transform_indices = @transform_0, window_bounds = array<i64: 2, 8, 32>}, {pipeline_mode = #tpu.pipeline_mode<synchronous>, transform_indices = @transform_1, window_bounds = array<i64: 8, 8>}, {transform_indices = @transform_2, window_bounds = array<i64: 1, 32, 96>}, {transform_indices = @transform_3, window_bounds = array<i64: 1, 1, 96>}, {transform_indices = @transform_4, window_bounds = array<i64: 1, 32, 32>}, {transform_indices = @transform_5, window_bounds = array<i64: 1, 1, 32>}, {transform_indices = @transform_6, window_bounds = array<i64: 1, 1, 32>}, {transform_indices = @transform_7, window_bounds = array<i64: 1, 1, 32>}, {transform_indices = @transform_8, window_bounds = array<i64: 1, 32, 64>}, {transform_indices = @transform_9, window_bounds = array<i64: 1, 1, 64>}, {transform_indices = @transform_10, window_bounds = array<i64: 1, 64, 32>}, {transform_indices = @transform_11, window_bounds = array<i64: 1, 1, 32>}, {transform_indices = @transform_12, window_bounds = array<i64: 1, 1, 32>}, {transform_indices = @transform_13, window_bounds = array<i64: 1, 1, 32>}, {transform_indices = @transform_14, window_bounds = array<i64: 2, 8, 32>}]} {
    %c0_i32 = arith.constant 0 : i32
    %0 = arith.cmpi eq, %arg1, %c0_i32 : i32
    %1 = arith.extui %0 : i1 to i32
    %c0_i32_0 = arith.constant 0 : i32
    %2 = arith.cmpi ne, %1, %c0_i32_0 : i32
    scf.if %2 {
      %c0_73 = arith.constant 0 : index
      %c0_74 = arith.constant 0 : index
      %c0_75 = arith.constant 0 : index
      %142 = vector.load %arg2[%c0_73, %c0_74, %c0_75] : memref<2x8x32xf32, #tpu.memory_space<vmem>>, vector<2x8x32xf32>
      %c0_76 = arith.constant 0 : index
      %c0_77 = arith.constant 0 : index
      %c0_78 = arith.constant 0 : index
      %143 = vector.load %arg17[%c0_76, %c0_77, %c0_78] : memref<2x8x32xf32, #tpu.memory_space<vmem>>, vector<2x8x32xf32>
      tpu.vector_store %arg17[%c0_76, %c0_77, %c0_78], %142 {strides = array<i32>} : memref<2x8x32xf32, #tpu.memory_space<vmem>>, vector<2x8x32xf32>,
    } else {
    }
    %c0 = arith.constant 0 : index
    %c0_1 = arith.constant 0 : index
    %c0_2 = arith.constant 0 : index
    %3 = vector.load %arg17[%c0, %c0_1, %c0_2] : memref<2x8x32xf32, #tpu.memory_space<vmem>>, vector<2x8x32xf32>
    %4 = vector.shape_cast %3 : vector<2x8x32xf32> to vector<16x32xf32>
    %c0_3 = arith.constant 0 : index
    %c0_4 = arith.constant 0 : index
    %5 = vector.load %arg3[%c0_3, %c0_4] : memref<8x8xf32, #tpu.memory_space<vmem>>, vector<8x8xf32>
    %c0_5 = arith.constant 0 : index
    %c0_6 = arith.constant 0 : index
    %c0_7 = arith.constant 0 : index
    %6 = vector.load %arg4[%c0_5, %c0_6, %c0_7] : memref<1x32x96xf32, #tpu.memory_space<vmem>>, vector<1x32x96xf32>
    %7 = vector.shape_cast %6 : vector<1x32x96xf32> to vector<32x96xf32>
    %cst = arith.constant dense<0.000000e+00> : vector<16x96xf32>
    %8 = tpu.matmul %4, %7, %cst {dimension_numbers = #tpu.dot_dimension_numbers<[1], [0], [0], [1], [0, 0, 1, 1], [], []>} : vector<16x32xf32>, vector<32x96xf32>, vector<16x96xf32> -> vector<16x96xf32>
    %c0_8 = arith.constant 0 : index
    %c0_9 = arith.constant 0 : index
    %c0_10 = arith.constant 0 : index
    %9 = vector.load %arg5[%c0_8, %c0_9, %c0_10] : memref<1x1x96xf32, #tpu.memory_space<vmem>>, vector<1x1x96xf32>
    %10 = vector.shape_cast %9 : vector<1x1x96xf32> to vector<1x96xf32>
    %11 = vector.broadcast %10 : vector<1x96xf32> to vector<16x96xf32>
    %12 = arith.addf %8, %11 : vector<16x96xf32>
    %13 = vector.shape_cast %12 : vector<16x96xf32> to vector<2x8x96xf32>
    %c0_11 = arith.constant 0 : index
    %c0_12 = arith.constant 0 : index
    %c0_13 = arith.constant 0 : index
    %14 = vector.load %arg6[%c0_11, %c0_12, %c0_13] : memref<1x32x32xf32, #tpu.memory_space<vmem>>, vector<1x32x32xf32>
    %15 = vector.shape_cast %14 : vector<1x32x32xf32> to vector<32x32xf32>
    %cst_14 = arith.constant 0.000000e+00 : f32
    %16 = vector.broadcast %cst_14 : f32 to vector<16x32xf32>
    %17 = vector.extract_strided_slice %13 {offsets = [0, 0, 0], sizes = [2, 8, 16], strides = [1, 1, 1]} : vector<2x8x96xf32> to vector<2x8x16xf32>
    %18 = vector.extract_strided_slice %13 {offsets = [0, 0, 32], sizes = [2, 8, 16], strides = [1, 1, 1]} : vector<2x8x96xf32> to vector<2x8x16xf32>
    %19 = vector.extract_strided_slice %13 {offsets = [0, 0, 64], sizes = [2, 8, 16], strides = [1, 1, 1]} : vector<2x8x96xf32> to vector<2x8x16xf32>
    "tpu.trace_start"() <{level = 10 : i32, message = "bqd,bkd->bqk"}> : () -> ()
    %cst_15 = arith.constant dense<0.000000e+00> : vector<2x8x8xf32>
    %20 = tpu.matmul %17, %18, %cst_15 {dimension_numbers = #tpu.dot_dimension_numbers<[2], [2], [1], [1], [0, 0, 0, 1, 1, 1], [0], [0]>} : vector<2x8x16xf32>, vector<2x8x16xf32>, vector<2x8x8xf32> -> vector<2x8x8xf32>
    "tpu.trace_stop"() : () -> ()
    %cst_16 = arith.constant 2.500000e-01 : f32
    %21 = vector.broadcast %cst_16 : f32 to vector<2x8x8xf32>
    %22 = arith.mulf %20, %21 : vector<2x8x8xf32>
    %23 = vector.shape_cast %5 : vector<8x8xf32> to vector<1x8x8xf32>
    %24 = vector.broadcast %23 : vector<1x8x8xf32> to vector<2x8x8xf32>
    %25 = arith.addf %22, %24 : vector<2x8x8xf32>
    %cst_17 = arith.constant dense<0xFF800000> : vector<2x8xf32>
    %26 = vector.multi_reduction <maximumf>, %25, %cst_17 [2] : vector<2x8x8xf32> to vector<2x8xf32>
    %27 = vector.shape_cast %26 : vector<2x8xf32> to vector<2x8x1xf32>
    %28 = vector.broadcast %27 : vector<2x8x1xf32> to vector<2x8x8xf32>
    %29 = arith.subf %25, %28 : vector<2x8x8xf32>
    %30 = math.exp %29 : vector<2x8x8xf32>
    %cst_18 = arith.constant dense<0.000000e+00> : vector<2x8xf32>
    %31 = vector.multi_reduction <add>, %30, %cst_18 [2] : vector<2x8x8xf32> to vector<2x8xf32>
    %32 = vector.shape_cast %31 : vector<2x8xf32> to vector<2x8x1xf32>
    %33 = tpu.reciprocal %32 {approx = true} : vector<2x8x1xf32> -> vector<2x8x1xf32>
    %34 = vector.broadcast %33 : vector<2x8x1xf32> to vector<2x8x8xf32>
    %35 = arith.mulf %30, %34 : vector<2x8x8xf32>
    "tpu.trace_start"() <{level = 10 : i32, message = "bqk,bkd->bqd"}> : () -> ()
    %cst_19 = arith.constant dense<0.000000e+00> : vector<2x8x16xf32>
    %36 = tpu.matmul %35, %19, %cst_19 {dimension_numbers = #tpu.dot_dimension_numbers<[2], [1], [1], [2], [0, 0, 0, 1, 1, 2], [0], [0]>} : vector<2x8x8xf32>, vector<2x8x16xf32>, vector<2x8x16xf32> -> vector<2x8x16xf32>
    "tpu.trace_stop"() : () -> ()
    %37 = vector.shape_cast %36 : vector<2x8x16xf32> to vector<16x16xf32>
    %38 = vector.extract_strided_slice %15 {offsets = [0, 0], sizes = [16, 32], strides = [1, 1]} : vector<32x32xf32> to vector<16x32xf32>
    %cst_20 = arith.constant dense<0.000000e+00> : vector<16x32xf32>
    %39 = tpu.matmul %37, %38, %cst_20 {dimension_numbers = #tpu.dot_dimension_numbers<[1], [0], [0], [1], [0, 0, 1, 1], [], []>} : vector<16x16xf32>, vector<16x32xf32>, vector<16x32xf32> -> vector<16x32xf32>
    %40 = arith.addf %16, %39 : vector<16x32xf32>
    %41 = vector.extract_strided_slice %13 {offsets = [0, 0, 16], sizes = [2, 8, 16], strides = [1, 1, 1]} : vector<2x8x96xf32> to vector<2x8x16xf32>
    %42 = vector.extract_strided_slice %13 {offsets = [0, 0, 48], sizes = [2, 8, 16], strides = [1, 1, 1]} : vector<2x8x96xf32> to vector<2x8x16xf32>
    %43 = vector.extract_strided_slice %13 {offsets = [0, 0, 80], sizes = [2, 8, 16], strides = [1, 1, 1]} : vector<2x8x96xf32> to vector<2x8x16xf32>
    "tpu.trace_start"() <{level = 10 : i32, message = "bqd,bkd->bqk"}> : () -> ()
    %cst_21 = arith.constant dense<0.000000e+00> : vector<2x8x8xf32>
    %44 = tpu.matmul %41, %42, %cst_21 {dimension_numbers = #tpu.dot_dimension_numbers<[2], [2], [1], [1], [0, 0, 0, 1, 1, 1], [0], [0]>} : vector<2x8x16xf32>, vector<2x8x16xf32>, vector<2x8x8xf32> -> vector<2x8x8xf32>
    "tpu.trace_stop"() : () -> ()
    %cst_22 = arith.constant 2.500000e-01 : f32
    %45 = vector.broadcast %cst_22 : f32 to vector<2x8x8xf32>
    %46 = arith.mulf %44, %45 : vector<2x8x8xf32>
    %47 = vector.shape_cast %5 : vector<8x8xf32> to vector<1x8x8xf32>
    %48 = vector.broadcast %47 : vector<1x8x8xf32> to vector<2x8x8xf32>
    %49 = arith.addf %46, %48 : vector<2x8x8xf32>
    %cst_23 = arith.constant dense<0xFF800000> : vector<2x8xf32>
    %50 = vector.multi_reduction <maximumf>, %49, %cst_23 [2] : vector<2x8x8xf32> to vector<2x8xf32>
    %51 = vector.shape_cast %50 : vector<2x8xf32> to vector<2x8x1xf32>
    %52 = vector.broadcast %51 : vector<2x8x1xf32> to vector<2x8x8xf32>
    %53 = arith.subf %49, %52 : vector<2x8x8xf32>
    %54 = math.exp %53 : vector<2x8x8xf32>
    %cst_24 = arith.constant dense<0.000000e+00> : vector<2x8xf32>
    %55 = vector.multi_reduction <add>, %54, %cst_24 [2] : vector<2x8x8xf32> to vector<2x8xf32>
    %56 = vector.shape_cast %55 : vector<2x8xf32> to vector<2x8x1xf32>
    %57 = tpu.reciprocal %56 {approx = true} : vector<2x8x1xf32> -> vector<2x8x1xf32>
    %58 = vector.broadcast %57 : vector<2x8x1xf32> to vector<2x8x8xf32>
    %59 = arith.mulf %54, %58 : vector<2x8x8xf32>
    "tpu.trace_start"() <{level = 10 : i32, message = "bqk,bkd->bqd"}> : () -> ()
    %cst_25 = arith.constant dense<0.000000e+00> : vector<2x8x16xf32>
    %60 = tpu.matmul %59, %43, %cst_25 {dimension_numbers = #tpu.dot_dimension_numbers<[2], [1], [1], [2], [0, 0, 0, 1, 1, 2], [0], [0]>} : vector<2x8x8xf32>, vector<2x8x16xf32>, vector<2x8x16xf32> -> vector<2x8x16xf32>
    "tpu.trace_stop"() : () -> ()
    %61 = vector.shape_cast %60 : vector<2x8x16xf32> to vector<16x16xf32>
    %62 = vector.extract_strided_slice %15 {offsets = [16, 0], sizes = [16, 32], strides = [1, 1]} : vector<32x32xf32> to vector<16x32xf32>
    %cst_26 = arith.constant dense<0.000000e+00> : vector<16x32xf32>
    %63 = tpu.matmul %61, %62, %cst_26 {dimension_numbers = #tpu.dot_dimension_numbers<[1], [0], [0], [1], [0, 0, 1, 1], [], []>} : vector<16x16xf32>, vector<16x32xf32>, vector<16x32xf32> -> vector<16x32xf32>
    %64 = arith.addf %40, %63 : vector<16x32xf32>
    %c0_27 = arith.constant 0 : index
    %c0_28 = arith.constant 0 : index
    %c0_29 = arith.constant 0 : index
    %65 = vector.load %arg7[%c0_27, %c0_28, %c0_29] : memref<1x1x32xf32, #tpu.memory_space<vmem>>, vector<1x1x32xf32>
    %66 = vector.shape_cast %65 : vector<1x1x32xf32> to vector<1x32xf32>
    %67 = vector.broadcast %66 : vector<1x32xf32> to vector<16x32xf32>
    %68 = arith.addf %64, %67 : vector<16x32xf32>
    %69 = arith.addf %4, %68 : vector<16x32xf32>
    %c0_30 = arith.constant 0 : index
    %c0_31 = arith.constant 0 : index
    %c0_32 = arith.constant 0 : index
    %70 = vector.load %arg8[%c0_30, %c0_31, %c0_32] : memref<1x1x32xf32, #tpu.memory_space<vmem>>, vector<1x1x32xf32>
    %71 = vector.shape_cast %70 : vector<1x1x32xf32> to vector<1x32xf32>
    %c0_33 = arith.constant 0 : index
    %c0_34 = arith.constant 0 : index
    %c0_35 = arith.constant 0 : index
    %72 = vector.load %arg9[%c0_33, %c0_34, %c0_35] : memref<1x1x32xf32, #tpu.memory_space<vmem>>, vector<1x1x32xf32>
    %73 = vector.shape_cast %72 : vector<1x1x32xf32> to vector<1x32xf32>
    %cst_36 = arith.constant dense<0.000000e+00> : vector<16xf32>
    %74 = vector.multi_reduction <add>, %69, %cst_36 [1] : vector<16x32xf32> to vector<16xf32>
    %75 = vector.shape_cast %74 : vector<16xf32> to vector<16x1xf32>
    %cst_37 = arith.constant 3.200000e+01 : f32
    %76 = vector.broadcast %cst_37 : f32 to vector<16x1xf32>
    %77 = arith.divf %75, %76 : vector<16x1xf32>
    %78 = vector.broadcast %77 : vector<16x1xf32> to vector<16x32xf32>
    %79 = arith.subf %69, %78 : vector<16x32xf32>
    %80 = arith.mulf %79, %79 : vector<16x32xf32>
    %cst_38 = arith.constant dense<0.000000e+00> : vector<16xf32>
    %81 = vector.multi_reduction <add>, %80, %cst_38 [1] : vector<16x32xf32> to vector<16xf32>
    %82 = vector.shape_cast %81 : vector<16xf32> to vector<16x1xf32>
    %cst_39 = arith.constant 3.200000e+01 : f32
    %83 = vector.broadcast %cst_39 : f32 to vector<16x1xf32>
    %84 = arith.divf %82, %83 : vector<16x1xf32>
    %85 = vector.broadcast %77 : vector<16x1xf32> to vector<16x32xf32>
    %86 = arith.subf %69, %85 : vector<16x32xf32>
    %cst_40 = arith.constant 9.99999974E-6 : f32
    %87 = vector.broadcast %cst_40 : f32 to vector<16x1xf32>
    %88 = arith.addf %84, %87 : vector<16x1xf32>
    %89 = math.rsqrt %88 : vector<16x1xf32>
    %90 = vector.broadcast %89 : vector<16x1xf32> to vector<16x32xf32>
    %91 = arith.mulf %86, %90 : vector<16x32xf32>
    %92 = vector.broadcast %71 : vector<1x32xf32> to vector<16x32xf32>
    %93 = arith.mulf %91, %92 : vector<16x32xf32>
    %94 = vector.broadcast %73 : vector<1x32xf32> to vector<16x32xf32>
    %95 = arith.addf %93, %94 : vector<16x32xf32>
    %c0_41 = arith.constant 0 : index
    %c0_42 = arith.constant 0 : index
    %c0_43 = arith.constant 0 : index
    %96 = vector.load %arg10[%c0_41, %c0_42, %c0_43] : memref<1x32x64xf32, #tpu.memory_space<vmem>>, vector<1x32x64xf32>
    %97 = vector.shape_cast %96 : vector<1x32x64xf32> to vector<32x64xf32>
    %cst_44 = arith.constant dense<0.000000e+00> : vector<16x64xf32>
    %98 = tpu.matmul %95, %97, %cst_44 {dimension_numbers = #tpu.dot_dimension_numbers<[1], [0], [0], [1], [0, 0, 1, 1], [], []>} : vector<16x32xf32>, vector<32x64xf32>, vector<16x64xf32> -> vector<16x64xf32>
    %c0_45 = arith.constant 0 : index
    %c0_46 = arith.constant 0 : index
    %c0_47 = arith.constant 0 : index
    %99 = vector.load %arg11[%c0_45, %c0_46, %c0_47] : memref<1x1x64xf32, #tpu.memory_space<vmem>>, vector<1x1x64xf32>
    %100 = vector.shape_cast %99 : vector<1x1x64xf32> to vector<1x64xf32>
    %101 = vector.broadcast %100 : vector<1x64xf32> to vector<16x64xf32>
    %102 = arith.addf %98, %101 : vector<16x64xf32>
    %cst_48 = arith.constant 0.000000e+00 : f32
    %103 = vector.broadcast %cst_48 : f32 to vector<16x64xf32>
    %104 = arith.maximumf %102, %103 : vector<16x64xf32>
    %c0_49 = arith.constant 0 : index
    %c0_50 = arith.constant 0 : index
    %c0_51 = arith.constant 0 : index
    %105 = vector.load %arg12[%c0_49, %c0_50, %c0_51] : memref<1x64x32xf32, #tpu.memory_space<vmem>>, vector<1x64x32xf32>
    %106 = vector.shape_cast %105 : vector<1x64x32xf32> to vector<64x32xf32>
    %cst_52 = arith.constant dense<0.000000e+00> : vector<16x32xf32>
    %107 = tpu.matmul %104, %106, %cst_52 {dimension_numbers = #tpu.dot_dimension_numbers<[1], [0], [0], [1], [0, 0, 1, 1], [], []>} : vector<16x64xf32>, vector<64x32xf32>, vector<16x32xf32> -> vector<16x32xf32>
    %c0_53 = arith.constant 0 : index
    %c0_54 = arith.constant 0 : index
    %c0_55 = arith.constant 0 : index
    %108 = vector.load %arg13[%c0_53, %c0_54, %c0_55] : memref<1x1x32xf32, #tpu.memory_space<vmem>>, vector<1x1x32xf32>
    %109 = vector.shape_cast %108 : vector<1x1x32xf32> to vector<1x32xf32>
    %110 = vector.broadcast %109 : vector<1x32xf32> to vector<16x32xf32>
    %111 = arith.addf %107, %110 : vector<16x32xf32>
    %112 = arith.addf %95, %111 : vector<16x32xf32>
    %c0_56 = arith.constant 0 : index
    %c0_57 = arith.constant 0 : index
    %c0_58 = arith.constant 0 : index
    %113 = vector.load %arg14[%c0_56, %c0_57, %c0_58] : memref<1x1x32xf32, #tpu.memory_space<vmem>>, vector<1x1x32xf32>
    %114 = vector.shape_cast %113 : vector<1x1x32xf32> to vector<1x32xf32>
    %c0_59 = arith.constant 0 : index
    %c0_60 = arith.constant 0 : index
    %c0_61 = arith.constant 0 : index
    %115 = vector.load %arg15[%c0_59, %c0_60, %c0_61] : memref<1x1x32xf32, #tpu.memory_space<vmem>>, vector<1x1x32xf32>
    %116 = vector.shape_cast %115 : vector<1x1x32xf32> to vector<1x32xf32>
    %cst_62 = arith.constant dense<0.000000e+00> : vector<16xf32>
    %117 = vector.multi_reduction <add>, %112, %cst_62 [1] : vector<16x32xf32> to vector<16xf32>
    %118 = vector.shape_cast %117 : vector<16xf32> to vector<16x1xf32>
    %cst_63 = arith.constant 3.200000e+01 : f32
    %119 = vector.broadcast %cst_63 : f32 to vector<16x1xf32>
    %120 = arith.divf %118, %119 : vector<16x1xf32>
    %121 = vector.broadcast %120 : vector<16x1xf32> to vector<16x32xf32>
    %122 = arith.subf %112, %121 : vector<16x32xf32>
    %123 = arith.mulf %122, %122 : vector<16x32xf32>
    %cst_64 = arith.constant dense<0.000000e+00> : vector<16xf32>
    %124 = vector.multi_reduction <add>, %123, %cst_64 [1] : vector<16x32xf32> to vector<16xf32>
    %125 = vector.shape_cast %124 : vector<16xf32> to vector<16x1xf32>
    %cst_65 = arith.constant 3.200000e+01 : f32
    %126 = vector.broadcast %cst_65 : f32 to vector<16x1xf32>
    %127 = arith.divf %125, %126 : vector<16x1xf32>
    %128 = vector.broadcast %120 : vector<16x1xf32> to vector<16x32xf32>
    %129 = arith.subf %112, %128 : vector<16x32xf32>
    %cst_66 = arith.constant 9.99999974E-6 : f32
    %130 = vector.broadcast %cst_66 : f32 to vector<16x1xf32>
    %131 = arith.addf %127, %130 : vector<16x1xf32>
    %132 = math.rsqrt %131 : vector<16x1xf32>
    %133 = vector.broadcast %132 : vector<16x1xf32> to vector<16x32xf32>
    %134 = arith.mulf %129, %133 : vector<16x32xf32>
    %135 = vector.broadcast %114 : vector<1x32xf32> to vector<16x32xf32>
    %136 = arith.mulf %134, %135 : vector<16x32xf32>
    %137 = vector.broadcast %116 : vector<1x32xf32> to vector<16x32xf32>
    %138 = arith.addf %136, %137 : vector<16x32xf32>
    %139 = vector.shape_cast %138 : vector<16x32xf32> to vector<2x8x32xf32>
    %c0_67 = arith.constant 0 : index
    %c0_68 = arith.constant 0 : index
    %c0_69 = arith.constant 0 : index
    %140 = vector.load %arg17[%c0_67, %c0_68, %c0_69] : memref<2x8x32xf32, #tpu.memory_space<vmem>>, vector<2x8x32xf32>
    tpu.vector_store %arg17[%c0_67, %c0_68, %c0_69], %139 {strides = array<i32>} : memref<2x8x32xf32, #tpu.memory_space<vmem>>, vector<2x8x32xf32>,
    %c0_70 = arith.constant 0 : index
    %c0_71 = arith.constant 0 : index
    %c0_72 = arith.constant 0 : index
    %141 = vector.load %arg16[%c0_70, %c0_71, %c0_72] : memref<2x8x32xf32, #tpu.memory_space<vmem>>, vector<2x8x32xf32>
    tpu.vector_store %arg16[%c0_70, %c0_71, %c0_72], %139 {strides = array<i32>} : memref<2x8x32xf32, #tpu.memory_space<vmem>>, vector<2x8x32xf32>,
    return
  }
  func.func @transform_0(%arg0: i32, %arg1: i32) -> (i32, i32, i32) {
    %c0_i32 = arith.constant 0 : i32
    %c0_i32_0 = arith.constant 0 : i32
    %c0_i32_1 = arith.constant 0 : i32
    return %arg0, %c0_i32, %c0_i32_0 : i32, i32, i32
  }
  func.func @transform_1(%arg0: i32, %arg1: i32) -> (i32, i32) {
    %c0_i32 = arith.constant 0 : i32
    %c0_i32_0 = arith.constant 0 : i32
    %c0_i32_1 = arith.constant 0 : i32
    return %c0_i32, %c0_i32_0 : i32, i32
  }
  func.func @transform_2(%arg0: i32, %arg1: i32) -> (i32, i32, i32) {
    %c0_i32 = arith.constant 0 : i32
    %c0_i32_0 = arith.constant 0 : i32
    %c0_i32_1 = arith.constant 0 : i32
    return %arg1, %c0_i32, %c0_i32_0 : i32, i32, i32
  }
  func.func @transform_3(%arg0: i32, %arg1: i32) -> (i32, i32, i32) {
    %c0_i32 = arith.constant 0 : i32
    %c0_i32_0 = arith.constant 0 : i32
    %c0_i32_1 = arith.constant 0 : i32
    return %arg1, %c0_i32, %c0_i32_0 : i32, i32, i32
  }
  func.func @transform_4(%arg0: i32, %arg1: i32) -> (i32, i32, i32) {
    %c0_i32 = arith.constant 0 : i32
    %c0_i32_0 = arith.constant 0 : i32
    %c0_i32_1 = arith.constant 0 : i32
    return %arg1, %c0_i32, %c0_i32_0 : i32, i32, i32
  }
  func.func @transform_5(%arg0: i32, %arg1: i32) -> (i32, i32, i32) {
    %c0_i32 = arith.constant 0 : i32
    %c0_i32_0 = arith.constant 0 : i32
    %c0_i32_1 = arith.constant 0 : i32
    return %arg1, %c0_i32, %c0_i32_0 : i32, i32, i32
  }
  func.func @transform_6(%arg0: i32, %arg1: i32) -> (i32, i32, i32) {
    %c0_i32 = arith.constant 0 : i32
    %c0_i32_0 = arith.constant 0 : i32
    %c0_i32_1 = arith.constant 0 : i32
    return %arg1, %c0_i32, %c0_i32_0 : i32, i32, i32
  }
  func.func @transform_7(%arg0: i32, %arg1: i32) -> (i32, i32, i32) {
    %c0_i32 = arith.constant 0 : i32
    %c0_i32_0 = arith.constant 0 : i32
    %c0_i32_1 = arith.constant 0 : i32
    return %arg1, %c0_i32, %c0_i32_0 : i32, i32, i32
  }
  func.func @transform_8(%arg0: i32, %arg1: i32) -> (i32, i32, i32) {
    %c0_i32 = arith.constant 0 : i32
    %c0_i32_0 = arith.constant 0 : i32
    %c0_i32_1 = arith.constant 0 : i32
    return %arg1, %c0_i32, %c0_i32_0 : i32, i32, i32
  }
  func.func @transform_9(%arg0: i32, %arg1: i32) -> (i32, i32, i32) {
    %c0_i32 = arith.constant 0 : i32
    %c0_i32_0 = arith.constant 0 : i32
    %c0_i32_1 = arith.constant 0 : i32
    return %arg1, %c0_i32, %c0_i32_0 : i32, i32, i32
  }
  func.func @transform_10(%arg0: i32, %arg1: i32) -> (i32, i32, i32) {
    %c0_i32 = arith.constant 0 : i32
    %c0_i32_0 = arith.constant 0 : i32
    %c0_i32_1 = arith.constant 0 : i32
    return %arg1, %c0_i32, %c0_i32_0 : i32, i32, i32
  }
  func.func @transform_11(%arg0: i32, %arg1: i32) -> (i32, i32, i32) {
    %c0_i32 = arith.constant 0 : i32
    %c0_i32_0 = arith.constant 0 : i32
    %c0_i32_1 = arith.constant 0 : i32
    return %arg1, %c0_i32, %c0_i32_0 : i32, i32, i32
  }
  func.func @transform_12(%arg0: i32, %arg1: i32) -> (i32, i32, i32) {
    %c0_i32 = arith.constant 0 : i32
    %c0_i32_0 = arith.constant 0 : i32
    %c0_i32_1 = arith.constant 0 : i32
    return %arg1, %c0_i32, %c0_i32_0 : i32, i32, i32
  }
  func.func @transform_13(%arg0: i32, %arg1: i32) -> (i32, i32, i32) {
    %c0_i32 = arith.constant 0 : i32
    %c0_i32_0 = arith.constant 0 : i32
    %c0_i32_1 = arith.constant 0 : i32
    return %arg1, %c0_i32, %c0_i32_0 : i32, i32, i32
  }
  func.func @transform_14(%arg0: i32, %arg1: i32) -> (i32, i32, i32) {
    %c0_i32 = arith.constant 0 : i32
    %c0_i32_0 = arith.constant 0 : i32
    %c0_i32_1 = arith.constant 0 : i32
    return %arg0, %c0_i32, %c0_i32_0 : i32, i32, i32
  }
}

</mosaic_0001>

<llo_original>
// kernel: tpu_custom_call.1
$region0: #{tpu_custom_call.1}
  #allocation0 [shape = 'u32[]', space=smem, size = 0x4, offset = 0x4, fixed_abs, tag = 'smem constant byte address 0x4 - core index']
  #allocation1 [shape = 'u32[72,128]{1,0:T(1,128)}', space=vmem, size = 0x9000, scoped, tag = 'internal scratch']
  #allocation2 [shape = 'f32[2,8,32]{2,1,0:T(8,128)}', space=vmem, size = 0x2000, scoped, tag = 'scratch operand']
  %s0 = inlined_call_operand.hbm [shape: f32[2,8,32], index: 0, kind: input, shape index: {}]
  %s1 = inlined_call_operand.hbm [shape: f32[8,8], index: 1, kind: input, shape index: {}]
  %s2 = inlined_call_operand.vmem [shape: f32[2,32,96], index: 2, kind: input, shape index: {}]
  %s3 = inlined_call_operand.vmem [shape: f32[2,1,96], index: 3, kind: input, shape index: {}]
  %s4 = inlined_call_operand.vmem [shape: f32[2,32,32], index: 4, kind: input, shape index: {}]
  %s5 = inlined_call_operand.hbm [shape: f32[2,1,32], index: 5, kind: input, shape index: {}]
  %s6 = inlined_call_operand.vmem [shape: f32[2,1,32], index: 6, kind: input, shape index: {}]
  %s7 = inlined_call_operand.hbm [shape: f32[2,1,32], index: 7, kind: input, shape index: {}]
  %s8 = inlined_call_operand.vmem [shape: f32[2,32,64], index: 8, kind: input, shape index: {}]
  %s9 = inlined_call_operand.vmem [shape: f32[2,1,64], index: 9, kind: input, shape index: {}]
  %s10 = inlined_call_operand.vmem [shape: f32[2,64,32], index: 10, kind: input, shape index: {}]
  %s11 = inlined_call_operand.vmem [shape: f32[2,1,32], index: 11, kind: input, shape index: {}]
  %s12 = inlined_call_operand.vmem [shape: f32[2,1,32], index: 12, kind: input, shape index: {}]
  %s13 = inlined_call_operand.hbm [shape: f32[2,1,32], index: 13, kind: input, shape index: {}]
  %s14 = inlined_call_operand.hbm [shape: f32[2,8,32], index: 14, kind: output, shape index: {}]
  %s15 = sld [smem:[#allocation0]]
  $region113: #{tpu_custom_call.1} parent=0
    _
  %s17 = ssub.s32 1, %s15
  %s18 = scalar_select 0, %s17, %s15
  $region1: #{tpu_custom_call.1} parent=0
    #allocation3 [shape = 'u8[8192]{0}', space=vmem, size = 0x2000, scoped, tag = 'input window, operand 0, single buffered']
    #allocation4 [shape = 's32[2]{0}', space=sflag, size = 0x8, scoped, tag = 'scoped memory for tpu_custom_call.1']
    #allocation5 [shape = 's32[2]{0}', space=sflag, size = 0x8, scoped, tag = 'scoped memory for tpu_custom_call.1']
    #allocation6 [shape = 'u8[4096]{0}', space=vmem, size = 0x1000, scoped, tag = 'input window, operand 1, single buffered']
    #allocation7 [shape = 's32[1]{0}', space=sflag, size = 0x4, scoped, tag = 'scoped memory for tpu_custom_call.1']
    #allocation8 [shape = 'u8[1024]{0}', space=vmem, size = 0x400, scoped, tag = 'input window, operand 5']
    #allocation9 [shape = 'u8[1024]{0}', space=vmem, size = 0x400, scoped, tag = 'input window, operand 7']
    #allocation10 [shape = 'u8[1024]{0}', space=vmem, size = 0x400, scoped, tag = 'input window, operand 13']
    #allocation11 [shape = 'u8[8192]{0}', space=vmem, size = 0x2000, scoped, tag = 'output window, operand 0, single buffered']
    %19 = vsyncpa [#allocation4], 0
    %20 = vsyncpa [#allocation7], 0
    %21 = vsyncpa [#allocation5], 0
    loop: start=0, step=1, limit=4
    $region2: #{tpu_custom_call.1} parent=1 // loop_pre_header
      _
    $region3: #{tpu_custom_call.1} parent=1 // loop_header
      %s23 = sphi 0, %s27
      %p24 = scmp.ge.s32.totalorder %s23, 4
      %s30 = sphi 0, %s42
      %s31 = sphi 0, %s38
      %s32 = sphi 0, %s30
      %s33 = sphi 0, %s31
      %s34 = sphi 0, %s32
      %s35 = sphi 0, %s33
      %s45 = sphi 0, %s47
      %s48 = sphi 0, %s45
      %s49 = sphi 0, %s48
      %s65 = sphi 0, %s49
      %s69 = sphi 0, %s69
      %s71 = sphi 0, %s69
      %s72 = sphi 0, %s71
      %s86 = sphi 0, %s72
      %s92 = sphi 0, %s94
      %s95 = sphi 0, %s92
      %s96 = sphi 0, %s95
      %s112 = sphi 0, %s96
      %s118 = sphi 0, %s120
      %s121 = sphi 0, %s118
      %s122 = sphi 0, %s121
      %s138 = sphi 0, %s122
      %s144 = sphi 0, %s146
      %s147 = sphi 0, %s144
      %s148 = sphi 0, %s147
      %s164 = sphi 0, %s148
      %s170 = sphi 0, %s172
      %s173 = sphi 0, %s170
      %s174 = sphi 0, %s173
      %s190 = sphi 0, %s174
      %s196 = sphi 0, %s198
      %s199 = sphi 0, %s196
      %s200 = sphi 0, %s199
      %s216 = sphi 0, %s200
      %s222 = sphi 0, %s224
      %s225 = sphi 0, %s222
      %s226 = sphi 0, %s225
      %s242 = sphi 0, %s226
      %s248 = sphi 0, %s250
      %s251 = sphi 0, %s248
      %s252 = sphi 0, %s251
      %s268 = sphi 0, %s252
      %s274 = sphi 0, %s276
      %s277 = sphi 0, %s274
      %s278 = sphi 0, %s277
      %s294 = sphi 0, %s278
      %s300 = sphi 0, %s302
      %s303 = sphi 0, %s300
      %s304 = sphi 0, %s303
      %s320 = sphi 0, %s304
      %s326 = sphi 0, %s328
      %s329 = sphi 0, %s326
      %s330 = sphi 0, %s329
      %s346 = sphi 0, %s330
      %s352 = sphi 0, %s354
      %s355 = sphi 0, %s352
      %s356 = sphi 0, %s355
      %s372 = sphi 0, %s356
      %s378 = sphi 0, %s380
      %s381 = sphi 0, %s378
      %s382 = sphi 0, %s381
      %s398 = sphi 0, %s382
      %s404 = sphi 0, %s406
      %s407 = sphi 0, %s404
      %s408 = sphi 0, %s407
      %s424 = sphi 0, %s408
    $region4: #{tpu_custom_call.1} parent=1 // loop_header_branch
      %26 = sbr.rel (%p24) target = $region8
    $region5: #{tpu_custom_call.1} parent=1 // loop_body
      %s28 = ssub.s32 %s23, 1
      %s29 = ssub.s32 %s23, 2
      %s36 = sadd.s32 1, %s31
      %p37 = scmp.ge.s32.totalorder %s36, 2
      %s38 = scalar_select %p37, 0, %s36
      %s39 = sadd.s32 1, %s30
      %s40 = scalar_select %p37, %s39, %s30
      %p41 = scmp.ge.s32.totalorder %s40, 1
      %s42 = scalar_select %p41, 0, %s40
      %s43 = ssub.s32 %s30, %s42
      %p44 = scmp.eq.s32.totalorder %s43, 0
      %s46 = sadd.s32 %s45, 1
      %s47 = scalar_select %p44, %s45, %s46
      %p50 = pneg %p44
      %p51 = scmp.eq.s32.totalorder %s23, 1
      %p52 = por %p50, %p51
      %p53 = scmp.ne.s32.totalorder %s45, %s48
      %p54 = scmp.eq.s32.totalorder %s23, 0
      %p55 = por %p53, %p54
      %p56 = scmp.ne.s32.totalorder %s45, %s48
      %p57 = scmp.eq.s32.totalorder %s28, 1
      %p58 = por %p56, %p57
      %p59 = scmp.ne.s32.totalorder %s48, %s49
      %p60 = scmp.eq.s32.totalorder %s28, 0
      %p61 = por %p59, %p60
      %p62 = scmp.ne.s32.totalorder %s48, %s49
      %p63 = scmp.eq.s32.totalorder %s29, 1
      %p64 = por %p62, %p63
      %p66 = scmp.ne.s32.totalorder %s49, %s65
      %p67 = scmp.eq.s32.totalorder %s29, 0
      %p68 = por %p66, %p67
      %s70 = sadd.s32 %s69, 1
      %p73 = scmp.eq.s32.totalorder %s23, 1
      %p74 = scmp.ne.s32.totalorder %s69, %s71
      %p75 = scmp.eq.s32.totalorder %s23, 0
      %p76 = por %p74, %p75
      %p77 = scmp.ne.s32.totalorder %s69, %s71
      %p78 = scmp.eq.s32.totalorder %s28, 1
      %p79 = por %p77, %p78
      %p80 = scmp.ne.s32.totalorder %s71, %s72
      %p81 = scmp.eq.s32.totalorder %s28, 0
      %p82 = por %p80, %p81
      %p83 = scmp.ne.s32.totalorder %s71, %s72
      %p84 = scmp.eq.s32.totalorder %s29, 1
      %p85 = por %p83, %p84
      %p87 = scmp.ne.s32.totalorder %s72, %s86
      %p88 = scmp.eq.s32.totalorder %s29, 0
      %p89 = por %p87, %p88
      %s90 = ssub.s32 %s31, %s38
      %p91 = scmp.eq.s32.totalorder %s90, 0
      %s93 = sadd.s32 %s92, 1
      %s94 = scalar_select %p91, %s92, %s93
      %p97 = pneg %p91
      %p98 = scmp.eq.s32.totalorder %s23, 1
      %p99 = por %p97, %p98
      %p100 = scmp.ne.s32.totalorder %s92, %s95
      %p101 = scmp.eq.s32.totalorder %s23, 0
      %p102 = por %p100, %p101
      %p103 = scmp.ne.s32.totalorder %s92, %s95
      %p104 = scmp.eq.s32.totalorder %s28, 1
      %p105 = por %p103, %p104
      %p106 = scmp.ne.s32.totalorder %s95, %s96
      %p107 = scmp.eq.s32.totalorder %s28, 0
      %p108 = por %p106, %p107
      %p109 = scmp.ne.s32.totalorder %s95, %s96
      %p110 = scmp.eq.s32.totalorder %s29, 1
      %p111 = por %p109, %p110
      %p113 = scmp.ne.s32.totalorder %s96, %s112
      %p114 = scmp.eq.s32.totalorder %s29, 0
      %p115 = por %p113, %p114
      %s116 = ssub.s32 %s31, %s38
      %p117 = scmp.eq.s32.totalorder %s116, 0
      %s119 = sadd.s32 %s118, 1
      %s120 = scalar_select %p117, %s118, %s119
      %p123 = pneg %p117
      %p124 = scmp.eq.s32.totalorder %s23, 1
      %p125 = por %p123, %p124
      %p126 = scmp.ne.s32.totalorder %s118, %s121
      %p127 = scmp.eq.s32.totalorder %s23, 0
      %p128 = por %p126, %p127
      %p129 = scmp.ne.s32.totalorder %s118, %s121
      %p130 = scmp.eq.s32.totalorder %s28, 1
      %p131 = por %p129, %p130
      %p132 = scmp.ne.s32.totalorder %s121, %s122
      %p133 = scmp.eq.s32.totalorder %s28, 0
      %p134 = por %p132, %p133
      %p135 = scmp.ne.s32.totalorder %s121, %s122
      %p136 = scmp.eq.s32.totalorder %s29, 1
      %p137 = por %p135, %p136
      %p139 = scmp.ne.s32.totalorder %s122, %s138
      %p140 = scmp.eq.s32.totalorder %s29, 0
      %p141 = por %p139, %p140
      %s142 = ssub.s32 %s31, %s38
      %p143 = scmp.eq.s32.totalorder %s142, 0
      %s145 = sadd.s32 %s144, 1
      %s146 = scalar_select %p143, %s144, %s145
      %p149 = pneg %p143
      %p150 = scmp.eq.s32.totalorder %s23, 1
      %p151 = por %p149, %p150
      %p152 = scmp.ne.s32.totalorder %s144, %s147
      %p153 = scmp.eq.s32.totalorder %s23, 0
      %p154 = por %p152, %p153
      %p155 = scmp.ne.s32.totalorder %s144, %s147
      %p156 = scmp.eq.s32.totalorder %s28, 1
      %p157 = por %p155, %p156
      %p158 = scmp.ne.s32.totalorder %s147, %s148
      %p159 = scmp.eq.s32.totalorder %s28, 0
      %p160 = por %p158, %p159
      %p161 = scmp.ne.s32.totalorder %s147, %s148
      %p162 = scmp.eq.s32.totalorder %s29, 1
      %p163 = por %p161, %p162
      %p165 = scmp.ne.s32.totalorder %s148, %s164
      %p166 = scmp.eq.s32.totalorder %s29, 0
      %p167 = por %p165, %p166
      %s168 = ssub.s32 %s31, %s38
      %p169 = scmp.eq.s32.totalorder %s168, 0
      %s171 = sadd.s32 %s170, 1
      %s172 = scalar_select %p169, %s170, %s171
      %p175 = pneg %p169
      %p176 = scmp.eq.s32.totalorder %s23, 1
      %p177 = por %p175, %p176
      %p178 = scmp.ne.s32.totalorder %s170, %s173
      %p179 = scmp.eq.s32.totalorder %s23, 0
      %p180 = por %p178, %p179
      %p181 = scmp.ne.s32.totalorder %s170, %s173
      %p182 = scmp.eq.s32.totalorder %s28, 1
      %p183 = por %p181, %p182
      %p184 = scmp.ne.s32.totalorder %s173, %s174
      %p185 = scmp.eq.s32.totalorder %s28, 0
      %p186 = por %p184, %p185
      %p187 = scmp.ne.s32.totalorder %s173, %s174
      %p188 = scmp.eq.s32.totalorder %s29, 1
      %p189 = por %p187, %p188
      %p191 = scmp.ne.s32.totalorder %s174, %s190
      %p192 = scmp.eq.s32.totalorder %s29, 0
      %p193 = por %p191, %p192
      %s194 = ssub.s32 %s31, %s38
      %p195 = scmp.eq.s32.totalorder %s194, 0
      %s197 = sadd.s32 %s196, 1
      %s198 = scalar_select %p195, %s196, %s197
      %p201 = pneg %p195
      %p202 = scmp.eq.s32.totalorder %s23, 1
      %p203 = por %p201, %p202
      %p204 = scmp.ne.s32.totalorder %s196, %s199
      %p205 = scmp.eq.s32.totalorder %s23, 0
      %p206 = por %p204, %p205
      %p207 = scmp.ne.s32.totalorder %s196, %s199
      %p208 = scmp.eq.s32.totalorder %s28, 1
      %p209 = por %p207, %p208
      %p210 = scmp.ne.s32.totalorder %s199, %s200
      %p211 = scmp.eq.s32.totalorder %s28, 0
      %p212 = por %p210, %p211
      %p213 = scmp.ne.s32.totalorder %s199, %s200
      %p214 = scmp.eq.s32.totalorder %s29, 1
      %p215 = por %p213, %p214
      %p217 = scmp.ne.s32.totalorder %s200, %s216
      %p218 = scmp.eq.s32.totalorder %s29, 0
      %p219 = por %p217, %p218
      %s220 = ssub.s32 %s31, %s38
      %p221 = scmp.eq.s32.totalorder %s220, 0
      %s223 = sadd.s32 %s222, 1
      %s224 = scalar_select %p221, %s222, %s223
      %p227 = pneg %p221
      %p228 = scmp.eq.s32.totalorder %s23, 1
      %p229 = por %p227, %p228
      %p230 = scmp.ne.s32.totalorder %s222, %s225
      %p231 = scmp.eq.s32.totalorder %s23, 0
      %p232 = por %p230, %p231
      %p233 = scmp.ne.s32.totalorder %s222, %s225
      %p234 = scmp.eq.s32.totalorder %s28, 1
      %p235 = por %p233, %p234
      %p236 = scmp.ne.s32.totalorder %s225, %s226
      %p237 = scmp.eq.s32.totalorder %s28, 0
      %p238 = por %p236, %p237
      %p239 = scmp.ne.s32.totalorder %s225, %s226
      %p240 = scmp.eq.s32.totalorder %s29, 1
      %p241 = por %p239, %p240
      %p243 = scmp.ne.s32.totalorder %s226, %s242
      %p244 = scmp.eq.s32.totalorder %s29, 0
      %p245 = por %p243, %p244
      %s246 = ssub.s32 %s31, %s38
      %p247 = scmp.eq.s32.totalorder %s246, 0
      %s249 = sadd.s32 %s248, 1
      %s250 = scalar_select %p247, %s248, %s249
      %p253 = pneg %p247
      %p254 = scmp.eq.s32.totalorder %s23, 1
      %p255 = por %p253, %p254
      %p256 = scmp.ne.s32.totalorder %s248, %s251
      %p257 = scmp.eq.s32.totalorder %s23, 0
      %p258 = por %p256, %p257
      %p259 = scmp.ne.s32.totalorder %s248, %s251
      %p260 = scmp.eq.s32.totalorder %s28, 1
      %p261 = por %p259, %p260
      %p262 = scmp.ne.s32.totalorder %s251, %s252
      %p263 = scmp.eq.s32.totalorder %s28, 0
      %p264 = por %p262, %p263
      %p265 = scmp.ne.s32.totalorder %s251, %s252
      %p266 = scmp.eq.s32.totalorder %s29, 1
      %p267 = por %p265, %p266
      %p269 = scmp.ne.s32.totalorder %s252, %s268
      %p270 = scmp.eq.s32.totalorder %s29, 0
      %p271 = por %p269, %p270
      %s272 = ssub.s32 %s31, %s38
      %p273 = scmp.eq.s32.totalorder %s272, 0
      %s275 = sadd.s32 %s274, 1
      %s276 = scalar_select %p273, %s274, %s275
      %p279 = pneg %p273
      %p280 = scmp.eq.s32.totalorder %s23, 1
      %p281 = por %p279, %p280
      %p282 = scmp.ne.s32.totalorder %s274, %s277
      %p283 = scmp.eq.s32.totalorder %s23, 0
      %p284 = por %p282, %p283
      %p285 = scmp.ne.s32.totalorder %s274, %s277
      %p286 = scmp.eq.s32.totalorder %s28, 1
      %p287 = por %p285, %p286
      %p288 = scmp.ne.s32.totalorder %s277, %s278
      %p289 = scmp.eq.s32.totalorder %s28, 0
      %p290 = por %p288, %p289
      %p291 = scmp.ne.s32.totalorder %s277, %s278
      %p292 = scmp.eq.s32.totalorder %s29, 1
      %p293 = por %p291, %p292
      %p295 = scmp.ne.s32.totalorder %s278, %s294
      %p296 = scmp.eq.s32.totalorder %s29, 0
      %p297 = por %p295, %p296
      %s298 = ssub.s32 %s31, %s38
      %p299 = scmp.eq.s32.totalorder %s298, 0
      %s301 = sadd.s32 %s300, 1
      %s302 = scalar_select %p299, %s300, %s301
      %p305 = pneg %p299
      %p306 = scmp.eq.s32.totalorder %s23, 1
      %p307 = por %p305, %p306
      %p308 = scmp.ne.s32.totalorder %s300, %s303
      %p309 = scmp.eq.s32.totalorder %s23, 0
      %p310 = por %p308, %p309
      %p311 = scmp.ne.s32.totalorder %s300, %s303
      %p312 = scmp.eq.s32.totalorder %s28, 1
      %p313 = por %p311, %p312
      %p314 = scmp.ne.s32.totalorder %s303, %s304
      %p315 = scmp.eq.s32.totalorder %s28, 0
      %p316 = por %p314, %p315
      %p317 = scmp.ne.s32.totalorder %s303, %s304
      %p318 = scmp.eq.s32.totalorder %s29, 1
      %p319 = por %p317, %p318
      %p321 = scmp.ne.s32.totalorder %s304, %s320
      %p322 = scmp.eq.s32.totalorder %s29, 0
      %p323 = por %p321, %p322
      %s324 = ssub.s32 %s31, %s38
      %p325 = scmp.eq.s32.totalorder %s324, 0
      %s327 = sadd.s32 %s326, 1
      %s328 = scalar_select %p325, %s326, %s327
      %p331 = pneg %p325
      %p332 = scmp.eq.s32.totalorder %s23, 1
      %p333 = por %p331, %p332
      %p334 = scmp.ne.s32.totalorder %s326, %s329
      %p335 = scmp.eq.s32.totalorder %s23, 0
      %p336 = por %p334, %p335
      %p337 = scmp.ne.s32.totalorder %s326, %s329
      %p338 = scmp.eq.s32.totalorder %s28, 1
      %p339 = por %p337, %p338
      %p340 = scmp.ne.s32.totalorder %s329, %s330
      %p341 = scmp.eq.s32.totalorder %s28, 0
      %p342 = por %p340, %p341
      %p343 = scmp.ne.s32.totalorder %s329, %s330
      %p344 = scmp.eq.s32.totalorder %s29, 1
      %p345 = por %p343, %p344
      %p347 = scmp.ne.s32.totalorder %s330, %s346
      %p348 = scmp.eq.s32.totalorder %s29, 0
      %p349 = por %p347, %p348
      %s350 = ssub.s32 %s31, %s38
      %p351 = scmp.eq.s32.totalorder %s350, 0
      %s353 = sadd.s32 %s352, 1
      %s354 = scalar_select %p351, %s352, %s353
      %p357 = pneg %p351
      %p358 = scmp.eq.s32.totalorder %s23, 1
      %p359 = por %p357, %p358
      %p360 = scmp.ne.s32.totalorder %s352, %s355
      %p361 = scmp.eq.s32.totalorder %s23, 0
      %p362 = por %p360, %p361
      %p363 = scmp.ne.s32.totalorder %s352, %s355
      %p364 = scmp.eq.s32.totalorder %s28, 1
      %p365 = por %p363, %p364
      %p366 = scmp.ne.s32.totalorder %s355, %s356
      %p367 = scmp.eq.s32.totalorder %s28, 0
      %p368 = por %p366, %p367
      %p369 = scmp.ne.s32.totalorder %s355, %s356
      %p370 = scmp.eq.s32.totalorder %s29, 1
      %p371 = por %p369, %p370
      %p373 = scmp.ne.s32.totalorder %s356, %s372
      %p374 = scmp.eq.s32.totalorder %s29, 0
      %p375 = por %p373, %p374
      %s376 = ssub.s32 %s31, %s38
      %p377 = scmp.eq.s32.totalorder %s376, 0
      %s379 = sadd.s32 %s378, 1
      %s380 = scalar_select %p377, %s378, %s379
      %p383 = pneg %p377
      %p384 = scmp.eq.s32.totalorder %s23, 1
      %p385 = por %p383, %p384
      %p386 = scmp.ne.s32.totalorder %s378, %s381
      %p387 = scmp.eq.s32.totalorder %s23, 0
      %p388 = por %p386, %p387
      %p389 = scmp.ne.s32.totalorder %s378, %s381
      %p390 = scmp.eq.s32.totalorder %s28, 1
      %p391 = por %p389, %p390
      %p392 = scmp.ne.s32.totalorder %s381, %s382
      %p393 = scmp.eq.s32.totalorder %s28, 0
      %p394 = por %p392, %p393
      %p395 = scmp.ne.s32.totalorder %s381, %s382
      %p396 = scmp.eq.s32.totalorder %s29, 1
      %p397 = por %p395, %p396
      %p399 = scmp.ne.s32.totalorder %s382, %s398
      %p400 = scmp.eq.s32.totalorder %s29, 0
      %p401 = por %p399, %p400
      %s402 = ssub.s32 %s30, %s42
      %p403 = scmp.eq.s32.totalorder %s402, 0
      %s405 = sadd.s32 %s404, 1
      %s406 = scalar_select %p403, %s404, %s405
      %p409 = pneg %p403
      %p410 = scmp.eq.s32.totalorder %s23, 1
      %p411 = por %p409, %p410
      %p412 = scmp.ne.s32.totalorder %s404, %s407
      %p413 = scmp.eq.s32.totalorder %s23, 0
      %p414 = por %p412, %p413
      %p415 = scmp.ne.s32.totalorder %s404, %s407
      %p416 = scmp.eq.s32.totalorder %s28, 1
      %p417 = por %p415, %p416
      %p418 = scmp.ne.s32.totalorder %s407, %s408
      %p419 = scmp.eq.s32.totalorder %s28, 0
      %p420 = por %p418, %p419
      %p421 = scmp.ne.s32.totalorder %s407, %s408
      %p422 = scmp.eq.s32.totalorder %s29, 1
      %p423 = por %p421, %p422
      %p425 = scmp.ne.s32.totalorder %s408, %s424
      %p426 = scmp.eq.s32.totalorder %s29, 0
      %p427 = por %p425, %p426
      %p428 = scmp.le.s32.totalorder 1, %s23
      %p429 = scmp.lt.s32.totalorder %s23, 3
      %p430 = pnand %p428, %p429
      %p431 = pneg %p430
      // Predicated region
      $region9: #{tpu_custom_call.1} parent=5 // pred_check
        _
      $region10: #{tpu_custom_call.1} parent=5 // pred_check_branch
        %433 = sbr.rel (%p430) target = $region12
      $region11: #{tpu_custom_call.1} parent=5 // pred_region
        %s434 = ssub.s32 %s23, 1
        // Predicated region
        $region13: #{tpu_custom_call.1} parent=11 // pred_check
          %p435 = pneg %p61
        $region14: #{tpu_custom_call.1} parent=11 // pred_check_branch
          %437 = sbr.rel (%p435) target = $region16
        $region15: #{tpu_custom_call.1} parent=11 // pred_region
          %s438 = smul.u32 2, %s32
          %440 = vsyncadd [#allocation4], 0
          %s441 = smul.addr %s438, 8
          %s442 = scalar_lea.hbm %s0, %s441
          %s443 = sshll.u32 %s442, 4
          %s444 = int_to_ptr.hbm [resolvable:$true] %s443
          %s445 = sshll.u32 [#allocation3], 4
          %s446 = int_to_ptr.vmem [resolvable:$true] %s445
          %451 = dma.hbm_to_vmem [thread:$0]  %s444, 256, %s446, [#allocation4], 128, 128, 8
        $region16: #{tpu_custom_call.1} parent=11 // pred_fallthru
          _
        // Predicated region
        $region17: #{tpu_custom_call.1} parent=11 // pred_check
          %p452 = pneg %p82
        $region18: #{tpu_custom_call.1} parent=11 // pred_check_branch
          %454 = sbr.rel (%p452) target = $region20
        $region19: #{tpu_custom_call.1} parent=11 // pred_region
          %456 = vsyncadd [#allocation7], 0
          %s458 = sshll.u32 %s1, 4
          %s459 = int_to_ptr.hbm [resolvable:$true] %s458
          %s460 = sshll.u32 [#allocation6], 4
          %s461 = int_to_ptr.vmem [resolvable:$true] %s460
          %463 = dma.hbm_to_vmem [thread:$0]  %s459, 128, %s461, [#allocation7]
        $region20: #{tpu_custom_call.1} parent=11 // pred_fallthru
          _
      $region12: #{tpu_custom_call.1} parent=5 // pred_fallthru
        _
      %p464 = scmp.lt.s32.totalorder %s23, 2
      // Predicated region
      $region21: #{tpu_custom_call.1} parent=5 // pred_check
        %p465 = pneg %p464
      $region22: #{tpu_custom_call.1} parent=5 // pred_check_branch
        %467 = sbr.rel (%p465) target = $region24
      $region23: #{tpu_custom_call.1} parent=5 // pred_region
        // Predicated region
        $region25: #{tpu_custom_call.1} parent=23 // pred_check
          %p468 = pneg %p102
        $region26: #{tpu_custom_call.1} parent=23 // pred_check_branch
          %470 = sbr.rel (%p468) target = $region28
        $region27: #{tpu_custom_call.1} parent=23 // pred_region
          %p471 = scmp.lt.s32.totalorder %s31, 1
          %s472 = scalar_select %p471, %s31, 1
          %s473 = smul.addr %s472, 4
          %s474 = smul.addr %s473, 8
          %s475 = scalar_lea.vmem %s2, %s474
        $region28: #{tpu_custom_call.1} parent=23 // pred_fallthru
          _
        // Predicated region
        $region29: #{tpu_custom_call.1} parent=23 // pred_check
          %p476 = pneg %p128
        $region30: #{tpu_custom_call.1} parent=23 // pred_check_branch
          %478 = sbr.rel (%p476) target = $region32
        $region31: #{tpu_custom_call.1} parent=23 // pred_region
          %p479 = scmp.lt.s32.totalorder %s31, 1
          %s480 = scalar_select %p479, %s31, 1
          %s481 = scalar_lea.vmem %s3, %s480
        $region32: #{tpu_custom_call.1} parent=23 // pred_fallthru
          _
        // Predicated region
        $region33: #{tpu_custom_call.1} parent=23 // pred_check
          %p482 = pneg %p154
        $region34: #{tpu_custom_call.1} parent=23 // pred_check_branch
          %484 = sbr.rel (%p482) target = $region36
        $region35: #{tpu_custom_call.1} parent=23 // pred_region
          %p485 = scmp.lt.s32.totalorder %s31, 1
          %s486 = scalar_select %p485, %s31, 1
          %s487 = smul.addr %s486, 4
          %s488 = smul.addr %s487, 8
          %s489 = scalar_lea.vmem %s4, %s488
        $region36: #{tpu_custom_call.1} parent=23 // pred_fallthru
          _
        // Predicated region
        $region37: #{tpu_custom_call.1} parent=23 // pred_check
          %p490 = pneg %p180
        $region38: #{tpu_custom_call.1} parent=23 // pred_check_branch
          %492 = sbr.rel (%p490) target = $region40
        $region39: #{tpu_custom_call.1} parent=23 // pred_region
          %s493 = sand.u32 %s23, 1
          %s494 = scalar_lea.sflag [#allocation4], %s493
          %s495 = sand.u32 %s170, 1
          %s496 = scalar_lea.vmem [#allocation8], %s495
          %498 = vsyncadd %s494, 0
          %s499 = scalar_lea.hbm %s5, %s31
          %s501 = sshll.u32 %s499, 4
          %s502 = int_to_ptr.hbm [resolvable:$true] %s501
          %s503 = sshll.u32 %s496, 4
          %s504 = int_to_ptr.vmem [resolvable:$true] %s503
          %506 = dma.hbm_to_vmem [thread:$0]  %s502, 16, %s504, %s494
        $region40: #{tpu_custom_call.1} parent=23 // pred_fallthru
          _
        // Predicated region
        $region41: #{tpu_custom_call.1} parent=23 // pred_check
          %p507 = pneg %p206
        $region42: #{tpu_custom_call.1} parent=23 // pred_check_branch
          %509 = sbr.rel (%p507) target = $region44
        $region43: #{tpu_custom_call.1} parent=23 // pred_region
          %p510 = scmp.lt.s32.totalorder %s31, 1
          %s511 = scalar_select %p510, %s31, 1
          %s512 = scalar_lea.vmem %s6, %s511
        $region44: #{tpu_custom_call.1} parent=23 // pred_fallthru
          _
        // Predicated region
        $region45: #{tpu_custom_call.1} parent=23 // pred_check
          %p513 = pneg %p232
        $region46: #{tpu_custom_call.1} parent=23 // pred_check_branch
          %515 = sbr.rel (%p513) target = $region48
        $region47: #{tpu_custom_call.1} parent=23 // pred_region
          %s516 = sand.u32 %s23, 1
          %s517 = scalar_lea.sflag [#allocation4], %s516
          %s518 = sand.u32 %s222, 1
          %s519 = scalar_lea.vmem [#allocation9], %s518
          %521 = vsyncadd %s517, 0
          %s522 = scalar_lea.hbm %s7, %s31
          %s524 = sshll.u32 %s522, 4
          %s525 = int_to_ptr.hbm [resolvable:$true] %s524
          %s526 = sshll.u32 %s519, 4
          %s527 = int_to_ptr.vmem [resolvable:$true] %s526
          %529 = dma.hbm_to_vmem [thread:$0]  %s525, 16, %s527, %s517
        $region48: #{tpu_custom_call.1} parent=23 // pred_fallthru
          _
        // Predicated region
        $region49: #{tpu_custom_call.1} parent=23 // pred_check
          %p530 = pneg %p258
        $region50: #{tpu_custom_call.1} parent=23 // pred_check_branch
          %532 = sbr.rel (%p530) target = $region52
        $region51: #{tpu_custom_call.1} parent=23 // pred_region
          %p533 = scmp.lt.s32.totalorder %s31, 1
          %s534 = scalar_select %p533, %s31, 1
          %s535 = smul.addr %s534, 4
          %s536 = smul.addr %s535, 8
          %s537 = scalar_lea.vmem %s8, %s536
        $region52: #{tpu_custom_call.1} parent=23 // pred_fallthru
          _
        // Predicated region
        $region53: #{tpu_custom_call.1} parent=23 // pred_check
          %p538 = pneg %p284
        $region54: #{tpu_custom_call.1} parent=23 // pred_check_branch
          %540 = sbr.rel (%p538) target = $region56
        $region55: #{tpu_custom_call.1} parent=23 // pred_region
          %p541 = scmp.lt.s32.totalorder %s31, 1
          %s542 = scalar_select %p541, %s31, 1
          %s543 = scalar_lea.vmem %s9, %s542
        $region56: #{tpu_custom_call.1} parent=23 // pred_fallthru
          _
        // Predicated region
        $region57: #{tpu_custom_call.1} parent=23 // pred_check
          %p544 = pneg %p310
        $region58: #{tpu_custom_call.1} parent=23 // pred_check_branch
          %546 = sbr.rel (%p544) target = $region60
        $region59: #{tpu_custom_call.1} parent=23 // pred_region
          %p547 = scmp.lt.s32.totalorder %s31, 1
          %s548 = scalar_select %p547, %s31, 1
          %s549 = smul.addr %s548, 8
          %s550 = smul.addr %s549, 8
          %s551 = scalar_lea.vmem %s10, %s550
        $region60: #{tpu_custom_call.1} parent=23 // pred_fallthru
          _
        // Predicated region
        $region61: #{tpu_custom_call.1} parent=23 // pred_check
          %p552 = pneg %p336
        $region62: #{tpu_custom_call.1} parent=23 // pred_check_branch
          %554 = sbr.rel (%p552) target = $region64
        $region63: #{tpu_custom_call.1} parent=23 // pred_region
          %p555 = scmp.lt.s32.totalorder %s31, 1
          %s556 = scalar_select %p555, %s31, 1
          %s557 = scalar_lea.vmem %s11, %s556
        $region64: #{tpu_custom_call.1} parent=23 // pred_fallthru
          _
        // Predicated region
        $region65: #{tpu_custom_call.1} parent=23 // pred_check
          %p558 = pneg %p362
        $region66: #{tpu_custom_call.1} parent=23 // pred_check_branch
          %560 = sbr.rel (%p558) target = $region68
        $region67: #{tpu_custom_call.1} parent=23 // pred_region
          %p561 = scmp.lt.s32.totalorder %s31, 1
          %s562 = scalar_select %p561, %s31, 1
          %s563 = scalar_lea.vmem %s12, %s562
        $region68: #{tpu_custom_call.1} parent=23 // pred_fallthru
          _
        // Predicated region
        $region69: #{tpu_custom_call.1} parent=23 // pred_check
          %p564 = pneg %p388
        $region70: #{tpu_custom_call.1} parent=23 // pred_check_branch
          %566 = sbr.rel (%p564) target = $region72
        $region71: #{tpu_custom_call.1} parent=23 // pred_region
          %s567 = sand.u32 %s23, 1
          %s568 = scalar_lea.sflag [#allocation4], %s567
          %s569 = sand.u32 %s378, 1
          %s570 = scalar_lea.vmem [#allocation10], %s569
          %572 = vsyncadd %s568, 0
          %s573 = scalar_lea.hbm %s13, %s31
          %s575 = sshll.u32 %s573, 4
          %s576 = int_to_ptr.hbm [resolvable:$true] %s575
          %s577 = sshll.u32 %s570, 4
          %s578 = int_to_ptr.vmem [resolvable:$true] %s577
          %580 = dma.hbm_to_vmem [thread:$0]  %s576, 16, %s578, %s568
        $region72: #{tpu_custom_call.1} parent=23 // pred_fallthru
          _
      $region24: #{tpu_custom_call.1} parent=5 // pred_fallthru
        _
      %p581 = scmp.le.s32.totalorder 1, %s23
      %p582 = scmp.lt.s32.totalorder %s23, 3
      %p583 = pnand %p581, %p582
      %p584 = pneg %p583
      // Predicated region
      $region73: #{tpu_custom_call.1} parent=5 // pred_check
        _
      $region74: #{tpu_custom_call.1} parent=5 // pred_check_branch
        %586 = sbr.rel (%p583) target = $region76
      $region75: #{tpu_custom_call.1} parent=5 // pred_region
        %s587 = ssub.s32 %s23, 1
        // Predicated region
        $region77: #{tpu_custom_call.1} parent=75 // pred_check
          %p588 = pneg %p61
        $region78: #{tpu_custom_call.1} parent=75 // pred_check_branch
          %590 = sbr.rel (%p588) target = $region80
        $region79: #{tpu_custom_call.1} parent=75 // pred_region
          %592 = dma.done [#allocation4], 256
        $region80: #{tpu_custom_call.1} parent=75 // pred_fallthru
          _
        // Predicated region
        $region81: #{tpu_custom_call.1} parent=75 // pred_check
          %p593 = pneg %p82
        $region82: #{tpu_custom_call.1} parent=75 // pred_check_branch
          %595 = sbr.rel (%p593) target = $region84
        $region83: #{tpu_custom_call.1} parent=75 // pred_region
          %597 = dma.done [#allocation7], 128
        $region84: #{tpu_custom_call.1} parent=75 // pred_fallthru
          _
        %s598 = sand.u32 %s28, 1
        %s599 = scalar_lea.sflag [#allocation4], %s598
        %s600 = sand.u32 %s173, 1
        %s601 = scalar_lea.vmem [#allocation8], %s600
        // Predicated region
        $region85: #{tpu_custom_call.1} parent=75 // pred_check
          %p602 = pneg %p186
        $region86: #{tpu_custom_call.1} parent=75 // pred_check_branch
          %604 = sbr.rel (%p602) target = $region88
        $region87: #{tpu_custom_call.1} parent=75 // pred_region
          %606 = dma.done %s599, 16
        $region88: #{tpu_custom_call.1} parent=75 // pred_fallthru
          _
        %s607 = sand.u32 %s28, 1
        %s608 = scalar_lea.sflag [#allocation4], %s607
        %s609 = sand.u32 %s225, 1
        %s610 = scalar_lea.vmem [#allocation9], %s609
        // Predicated region
        $region89: #{tpu_custom_call.1} parent=75 // pred_check
          %p611 = pneg %p238
        $region90: #{tpu_custom_call.1} parent=75 // pred_check_branch
          %613 = sbr.rel (%p611) target = $region92
        $region91: #{tpu_custom_call.1} parent=75 // pred_region
          %615 = dma.done %s608, 16
        $region92: #{tpu_custom_call.1} parent=75 // pred_fallthru
          _
        %s616 = sand.u32 %s28, 1
        %s617 = scalar_lea.sflag [#allocation4], %s616
        %s618 = sand.u32 %s381, 1
        %s619 = scalar_lea.vmem [#allocation10], %s618
        // Predicated region
        $region93: #{tpu_custom_call.1} parent=75 // pred_check
          %p620 = pneg %p394
        $region94: #{tpu_custom_call.1} parent=75 // pred_check_branch
          %622 = sbr.rel (%p620) target = $region96
        $region95: #{tpu_custom_call.1} parent=75 // pred_region
          %624 = dma.done %s617, 16
        $region96: #{tpu_custom_call.1} parent=75 // pred_fallthru
          _
        %p625 = pneg %p61
        %p626 = pneg %p58
        %p627 = pneg %p82
        %p628 = pneg %p79
        %p629 = scmp.lt.s32.totalorder %s33, 1
        %s630 = scalar_select %p629, %s33, 1
        %s631 = smul.addr %s630, 4
        %s632 = smul.addr %s631, 8
        %s633 = scalar_lea.vmem %s2, %s632
        %p634 = pneg %p108
        %p635 = pneg %p105
        %p636 = scmp.lt.s32.totalorder %s33, 1
        %s637 = scalar_select %p636, %s33, 1
        %s638 = scalar_lea.vmem %s3, %s637
        %p639 = pneg %p134
        %p640 = pneg %p131
        %p641 = scmp.lt.s32.totalorder %s33, 1
        %s642 = scalar_select %p641, %s33, 1
        %s643 = smul.addr %s642, 4
        %s644 = smul.addr %s643, 8
        %s645 = scalar_lea.vmem %s4, %s644
        %p646 = pneg %p160
        %p647 = pneg %p157
        %s648 = sand.u32 %s28, 1
        %s649 = scalar_lea.sflag [#allocation4], %s648
        %s650 = sand.u32 %s173, 1
        %s651 = scalar_lea.vmem [#allocation8], %s650
        %p652 = pneg %p186
        %p653 = pneg %p183
        %p654 = scmp.lt.s32.totalorder %s33, 1
        %s655 = scalar_select %p654, %s33, 1
        %s656 = scalar_lea.vmem %s6, %s655
        %p657 = pneg %p212
        %p658 = pneg %p209
        %s659 = sand.u32 %s28, 1
        %s660 = scalar_lea.sflag [#allocation4], %s659
        %s661 = sand.u32 %s225, 1
        %s662 = scalar_lea.vmem [#allocation9], %s661
        %p663 = pneg %p238
        %p664 = pneg %p235
        %p665 = scmp.lt.s32.totalorder %s33, 1
        %s666 = scalar_select %p665, %s33, 1
        %s667 = smul.addr %s666, 4
        %s668 = smul.addr %s667, 8
        %s669 = scalar_lea.vmem %s8, %s668
        %p670 = pneg %p264
        %p671 = pneg %p261
        %p672 = scmp.lt.s32.totalorder %s33, 1
        %s673 = scalar_select %p672, %s33, 1
        %s674 = scalar_lea.vmem %s9, %s673
        %p675 = pneg %p290
        %p676 = pneg %p287
        %p677 = scmp.lt.s32.totalorder %s33, 1
        %s678 = scalar_select %p677, %s33, 1
        %s679 = smul.addr %s678, 8
        %s680 = smul.addr %s679, 8
        %s681 = scalar_lea.vmem %s10, %s680
        %p682 = pneg %p316
        %p683 = pneg %p313
        %p684 = scmp.lt.s32.totalorder %s33, 1
        %s685 = scalar_select %p684, %s33, 1
        %s686 = scalar_lea.vmem %s11, %s685
        %p687 = pneg %p342
        %p688 = pneg %p339
        %p689 = scmp.lt.s32.totalorder %s33, 1
        %s690 = scalar_select %p689, %s33, 1
        %s691 = scalar_lea.vmem %s12, %s690
        %p692 = pneg %p368
        %p693 = pneg %p365
        %s694 = sand.u32 %s28, 1
        %s695 = scalar_lea.sflag [#allocation4], %s694
        %s696 = sand.u32 %s381, 1
        %s697 = scalar_lea.vmem [#allocation10], %s696
        %p698 = pneg %p394
        %p699 = pneg %p391
        %p700 = pneg %p420
        %p701 = pneg %p417
        %s702 = smul.u32 2, %s32
        %p703 = scmp.lt.s32.totalorder %s33, 1
        %s704 = scalar_select %p703, %s33, 1
        %s705 = smul.addr %s704, 4
        %s706 = smul.addr %s705, 8
        %s707 = scalar_lea.vmem %s2, %s706
        %p708 = scmp.lt.s32.totalorder %s33, 1
        %s709 = scalar_select %p708, %s33, 1
        %s710 = scalar_lea.vmem %s3, %s709
        %p711 = scmp.lt.s32.totalorder %s33, 1
        %s712 = scalar_select %p711, %s33, 1
        %s713 = smul.addr %s712, 4
        %s714 = smul.addr %s713, 8
        %s715 = scalar_lea.vmem %s4, %s714
        %p716 = scmp.lt.s32.totalorder %s33, 1
        %s717 = scalar_select %p716, %s33, 1
        %s718 = scalar_lea.vmem %s6, %s717
        %p719 = scmp.lt.s32.totalorder %s33, 1
        %s720 = scalar_select %p719, %s33, 1
        %s721 = smul.addr %s720, 4
        %s722 = smul.addr %s721, 8
        %s723 = scalar_lea.vmem %s8, %s722
        %p724 = scmp.lt.s32.totalorder %s33, 1
        %s725 = scalar_select %p724, %s33, 1
        %s726 = scalar_lea.vmem %s9, %s725
        %p727 = scmp.lt.s32.totalorder %s33, 1
        %s728 = scalar_select %p727, %s33, 1
        %s729 = smul.addr %s728, 8
        %s730 = smul.addr %s729, 8
        %s731 = scalar_lea.vmem %s10, %s730
        %p732 = scmp.lt.s32.totalorder %s33, 1
        %s733 = scalar_select %p732, %s33, 1
        %s734 = scalar_lea.vmem %s11, %s733
        %p735 = scmp.lt.s32.totalorder %s33, 1
        %s736 = scalar_select %p735, %s33, 1
        %s737 = scalar_lea.vmem %s12, %s736
        %s738 = smul.u32 2, %s32
        %p739 = scmp.eq.s32.totalorder %s33, 0
        // Predicated region
        $region97: #{tpu_custom_call.1} parent=75 // pred_check
          %p740 = pneg %p739
        $region98: #{tpu_custom_call.1} parent=75 // pred_check_branch
          %742 = sbr.rel (%p740) target = $region100
        $region99: #{tpu_custom_call.1} parent=75 // pred_region
          %v743 = vld [vmem:[#allocation3] sm:$0xff]
          %v744 = vld [vmem:[#allocation3 + $0x8] sm:$0xff]
          %vm745 = vcmask 261120
          %746 = vst.msk [vmem:[#allocation2] sm:$0xff] %vm745, %v743
          %747 = vst.msk [vmem:[#allocation2 + $0x8] sm:$0xff] %vm745, %v744
        $region100: #{tpu_custom_call.1} parent=75 // pred_fallthru
          _
        %v748 = vld [vmem:[#allocation2] sm:$0xff]
        %v749 = vld [vmem:[#allocation2 + $0x8] sm:$0xff]
        %v750 = vld [vmem:[#allocation6] sm:$0xff]
        %v751 = vld [vmem:[%s707] sm:$0xff]
        %v752 = vld [vmem:[%s707 + $0x8] sm:$0xff]
        %v753 = vld [vmem:[%s707 + $0x10] sm:$0xff]
        %v754 = vld [vmem:[%s707 + $0x18] sm:$0xff]
        %v755 = vld [vmem:[%s710] sm:$0x1]
        %v757 = vperm.slane %v755, 0
        %vm759 = vcmask 261120
        %v761 = vsel %vm759, %v748, 0
        %v764 = vsel %vm759, %v749, 0
        %766 = vmatpush.msra.mxu0 0.0
        %767 = vmatpush.msra.mxu0 0.0
        %768 = vmatpush.msra.mxu0 0.0
        %769 = vmatpush.msra.mxu0 0.0
        %770 = vmatpush.msra.mxu0 0.0
        %771 = vmatpush.msra.mxu0 0.0
        %772 = vmatpush.msra.mxu0 0.0
        %773 = vmatpush.msra.mxu0 0.0
        %774 = vmatpush.msra.mxu0 0.0
        %775 = vmatpush.msra.mxu0 0.0
        %776 = vmatpush.msra.mxu0 0.0
        %777 = vmatpush.msra.mxu0 0.0
        %778 = vmatpush.msra.mxu0 %v754
        %779 = vmatpush.msra.mxu0 %v753
        %780 = vmatpush.msra.mxu0 %v752
        %781 = vmatpush.msra.mxu0 %v751
        %782 = vmatmul.f32.gmra.mxu0 %v761
        %v783 = vpop.f32.mrf.mxu0
        %v784 = vadd.f32 %v757, %v783
        %785 = vmatmul.f32.gmra.mxu0 %v764
        %v786 = vpop.f32.mrf.mxu0
        %v787 = vadd.f32 %v757, %v786
        %788 = vdwg.mxu0
        %v789 = vld [vmem:[%s715] sm:$0xff]
        %v790 = vld [vmem:[%s715 + $0x8] sm:$0xff]
        %v791 = vld [vmem:[%s715 + $0x10] sm:$0xff]
        %v792 = vld [vmem:[%s715 + $0x18] sm:$0xff]
        %794 = vrot.lane.b32.xlu0 %v784, 96
        %v795 = vpop.permute.xlu0 %794
        %vm796 = vcmask 130048
        %v797 = vsel %vm796, %v784, 0
        %v799 = vsel %vm796, %v795, 0
        %801 = vmatpush.xpose.msra.mxu0 0.0
        %802 = vmatpush.xpose.msra.mxu0 0.0
        %803 = vmatpush.xpose.msra.mxu0 0.0
        %804 = vmatpush.xpose.msra.mxu0 0.0
        %805 = vmatpush.xpose.msra.mxu0 0.0
        %806 = vmatpush.xpose.msra.mxu0 0.0
        %807 = vmatpush.xpose.msra.mxu0 0.0
        %808 = vmatpush.xpose.msra.mxu0 0.0
        %809 = vmatpush.xpose.msra.mxu0 0.0
        %810 = vmatpush.xpose.msra.mxu0 0.0
        %811 = vmatpush.xpose.msra.mxu0 0.0
        %812 = vmatpush.xpose.msra.mxu0 0.0
        %813 = vmatpush.xpose.msra.mxu0 0.0
        %814 = vmatpush.xpose.msra.mxu0 0.0
        %815 = vmatpush.xpose.msra.mxu0 0.0
        %816 = vmatpush.xpose.msra.mxu0 %v799
        %817 = vmatmul.f32.gmra.mxu0 %v797
        %v818 = vpop.f32.mrf.mxu0
        %v819 = vadd.f32 0.0, %v818
        %820 = vdwg.mxu0
        %822 = vrot.lane.b32.xlu0 %v787, 96
        %v823 = vpop.permute.xlu0 %822
        %v824 = vsel %vm796, %v787, 0
        %v826 = vsel %vm796, %v823, 0
        %828 = vmatpush.xpose.msra.mxu0 0.0
        %829 = vmatpush.xpose.msra.mxu0 0.0
        %830 = vmatpush.xpose.msra.mxu0 0.0
        %831 = vmatpush.xpose.msra.mxu0 0.0
        %832 = vmatpush.xpose.msra.mxu0 0.0
        %833 = vmatpush.xpose.msra.mxu0 0.0
        %834 = vmatpush.xpose.msra.mxu0 0.0
        %835 = vmatpush.xpose.msra.mxu0 0.0
        %836 = vmatpush.xpose.msra.mxu0 0.0
        %837 = vmatpush.xpose.msra.mxu0 0.0
        %838 = vmatpush.xpose.msra.mxu0 0.0
        %839 = vmatpush.xpose.msra.mxu0 0.0
        %840 = vmatpush.xpose.msra.mxu0 0.0
        %841 = vmatpush.xpose.msra.mxu0 0.0
        %842 = vmatpush.xpose.msra.mxu0 0.0
        %843 = vmatpush.xpose.msra.mxu0 %v826
        %844 = vmatmul.f32.gmra.mxu0 %v824
        %v845 = vpop.f32.mrf.mxu0
        %v846 = vadd.f32 0.0, %v845
        %847 = vdwg.mxu0
        %v848 = vmul.f32 %v819, 0.25
        %v849 = vmul.f32 %v846, 0.25
        %v850 = vadd.f32 %v848, %v750
        %v851 = vadd.f32 %v849, %v750
        %vm852 = vcmask 64512
        %v853 = vsel %vm852, %v850, -inf
        %854 = vmax.xlane.f32.xlu0 %v853
        %v855 = vpop.xlane.xlu0 %854
        %v856 = vsel %vm852, %v851, -inf
        %857 = vmax.xlane.f32.xlu0 %v856
        %v858 = vpop.xlane.xlu0 %857
        %v859 = vsub.f32 %v850, %v855
        %v860 = vsub.f32 %v851, %v858
        %v861 = vmul.f32 %v859, 1.442695
        %v862 = vpow.pop %v861
        %v863 = vmul.f32 %v860, 1.442695
        %v864 = vpow.pop %v863
        %v865 = vsel %vm852, %v862, 0.0
        %866 = vadd.xlane.f32.xlu0 %v865
        %v867 = vpop.xlane.xlu0 %866
        %v868 = vsel %vm852, %v864, 0.0
        %869 = vadd.xlane.f32.xlu0 %v868
        %v870 = vpop.xlane.xlu0 %869
        %v871 = vrcp.pop %v867
        %v872 = vrcp.pop %v870
        %v873 = vmul.f32 %v862, %v871
        %v874 = vmul.f32 %v864, %v872
        %875 = vrot.lane.b32.xlu0 %v784, 64
        %v876 = vpop.permute.xlu0 %875
        %v879 = vsel %vm852, %v873, 0
        %881 = vmatpush.msra.mxu0 0.0
        %882 = vmatpush.msra.mxu0 0.0
        %883 = vmatpush.msra.mxu0 0.0
        %884 = vmatpush.msra.mxu0 0.0
        %885 = vmatpush.msra.mxu0 0.0
        %886 = vmatpush.msra.mxu0 0.0
        %887 = vmatpush.msra.mxu0 0.0
        %888 = vmatpush.msra.mxu0 0.0
        %889 = vmatpush.msra.mxu0 0.0
        %890 = vmatpush.msra.mxu0 0.0
        %891 = vmatpush.msra.mxu0 0.0
        %892 = vmatpush.msra.mxu0 0.0
        %893 = vmatpush.msra.mxu0 0.0
        %894 = vmatpush.msra.mxu0 0.0
        %895 = vmatpush.msra.mxu0 0.0
        %896 = vmatpush.msra.mxu0 %v876
        %897 = vmatmul.f32.gmra.mxu0 %v879
        %v898 = vpop.f32.mrf.mxu0
        %v899 = vadd.f32 0.0, %v898
        %900 = vdwg.mxu0
        %901 = vrot.lane.b32.xlu0 %v787, 64
        %v902 = vpop.permute.xlu0 %901
        %v905 = vsel %vm852, %v874, 0
        %907 = vmatpush.msra.mxu0 0.0
        %908 = vmatpush.msra.mxu0 0.0
        %909 = vmatpush.msra.mxu0 0.0
        %910 = vmatpush.msra.mxu0 0.0
        %911 = vmatpush.msra.mxu0 0.0
        %912 = vmatpush.msra.mxu0 0.0
        %913 = vmatpush.msra.mxu0 0.0
        %914 = vmatpush.msra.mxu0 0.0
        %915 = vmatpush.msra.mxu0 0.0
        %916 = vmatpush.msra.mxu0 0.0
        %917 = vmatpush.msra.mxu0 0.0
        %918 = vmatpush.msra.mxu0 0.0
        %919 = vmatpush.msra.mxu0 0.0
        %920 = vmatpush.msra.mxu0 0.0
        %921 = vmatpush.msra.mxu0 0.0
        %922 = vmatpush.msra.mxu0 %v902
        %923 = vmatmul.f32.gmra.mxu0 %v905
        %v924 = vpop.f32.mrf.mxu0
        %v925 = vadd.f32 0.0, %v924
        %926 = vdwg.mxu0
        %927 = vrot.lane.b32.xlu0 %v784, 112
        %v928 = vpop.permute.xlu0 %927
        %929 = vrot.lane.b32.xlu0 %v784, 80
        %v930 = vpop.permute.xlu0 %929
        %v931 = vsel %vm796, %v928, 0
        %v933 = vsel %vm796, %v930, 0
        %935 = vmatpush.xpose.msra.mxu0 0.0
        %936 = vmatpush.xpose.msra.mxu0 0.0
        %937 = vmatpush.xpose.msra.mxu0 0.0
        %938 = vmatpush.xpose.msra.mxu0 0.0
        %939 = vmatpush.xpose.msra.mxu0 0.0
        %940 = vmatpush.xpose.msra.mxu0 0.0
        %941 = vmatpush.xpose.msra.mxu0 0.0
        %942 = vmatpush.xpose.msra.mxu0 0.0
        %943 = vmatpush.xpose.msra.mxu0 0.0
        %944 = vmatpush.xpose.msra.mxu0 0.0
        %945 = vmatpush.xpose.msra.mxu0 0.0
        %946 = vmatpush.xpose.msra.mxu0 0.0
        %947 = vmatpush.xpose.msra.mxu0 0.0
        %948 = vmatpush.xpose.msra.mxu0 0.0
        %949 = vmatpush.xpose.msra.mxu0 0.0
        %950 = vmatpush.xpose.msra.mxu0 %v933
        %951 = vmatmul.f32.gmra.mxu0 %v931
        %v952 = vpop.f32.mrf.mxu0
        %v953 = vadd.f32 0.0, %v952
        %954 = vdwg.mxu0
        %955 = vrot.lane.b32.xlu0 %v787, 112
        %v956 = vpop.permute.xlu0 %955
        %957 = vrot.lane.b32.xlu0 %v787, 80
        %v958 = vpop.permute.xlu0 %957
        %v959 = vsel %vm796, %v956, 0
        %v961 = vsel %vm796, %v958, 0
        %963 = vmatpush.xpose.msra.mxu0 0.0
        %964 = vmatpush.xpose.msra.mxu0 0.0
        %965 = vmatpush.xpose.msra.mxu0 0.0
        %966 = vmatpush.xpose.msra.mxu0 0.0
        %967 = vmatpush.xpose.msra.mxu0 0.0
        %968 = vmatpush.xpose.msra.mxu0 0.0
        %969 = vmatpush.xpose.msra.mxu0 0.0
        %970 = vmatpush.xpose.msra.mxu0 0.0
        %971 = vmatpush.xpose.msra.mxu0 0.0
        %972 = vmatpush.xpose.msra.mxu0 0.0
        %973 = vmatpush.xpose.msra.mxu0 0.0
        %974 = vmatpush.xpose.msra.mxu0 0.0
        %975 = vmatpush.xpose.msra.mxu0 0.0
        %976 = vmatpush.xpose.msra.mxu0 0.0
        %977 = vmatpush.xpose.msra.mxu0 0.0
        %978 = vmatpush.xpose.msra.mxu0 %v961
        %979 = vmatmul.f32.gmra.mxu0 %v959
        %v980 = vpop.f32.mrf.mxu0
        %v981 = vadd.f32 0.0, %v980
        %982 = vdwg.mxu0
        %v983 = vmul.f32 %v953, 0.25
        %v984 = vmul.f32 %v981, 0.25
        %v985 = vadd.f32 %v983, %v750
        %v986 = vadd.f32 %v984, %v750
        %v987 = vsel %vm852, %v985, -inf
        %988 = vmax.xlane.f32.xlu0 %v987
        %v989 = vpop.xlane.xlu0 %988
        %v990 = vsel %vm852, %v986, -inf
        %991 = vmax.xlane.f32.xlu0 %v990
        %v992 = vpop.xlane.xlu0 %991
        %v993 = vsub.f32 %v985, %v989
        %v994 = vsub.f32 %v986, %v992
        %v995 = vmul.f32 %v993, 1.442695
        %v996 = vpow.pop %v995
        %v997 = vmul.f32 %v994, 1.442695
        %v998 = vpow.pop %v997
        %v999 = vsel %vm852, %v996, 0.0
        %1000 = vadd.xlane.f32.xlu0 %v999
        %v1001 = vpop.xlane.xlu0 %1000
        %v1002 = vsel %vm852, %v998, 0.0
        %1003 = vadd.xlane.f32.xlu0 %v1002
        %v1004 = vpop.xlane.xlu0 %1003
        %v1005 = vrcp.pop %v1001
        %v1006 = vrcp.pop %v1004
        %v1007 = vmul.f32 %v996, %v1005
        %v1008 = vmul.f32 %v998, %v1006
        %1009 = vrot.lane.b32.xlu0 %v784, 48
        %v1010 = vpop.permute.xlu0 %1009
        %v1013 = vsel %vm852, %v1007, 0
        %1015 = vmatpush.msra.mxu0 0.0
        %1016 = vmatpush.msra.mxu0 0.0
        %1017 = vmatpush.msra.mxu0 0.0
        %1018 = vmatpush.msra.mxu0 0.0
        %1019 = vmatpush.msra.mxu0 0.0
        %1020 = vmatpush.msra.mxu0 0.0
        %1021 = vmatpush.msra.mxu0 0.0
        %1022 = vmatpush.msra.mxu0 0.0
        %1023 = vmatpush.msra.mxu0 0.0
        %1024 = vmatpush.msra.mxu0 0.0
        %1025 = vmatpush.msra.mxu0 0.0
        %1026 = vmatpush.msra.mxu0 0.0
        %1027 = vmatpush.msra.mxu0 0.0
        %1028 = vmatpush.msra.mxu0 0.0
        %1029 = vmatpush.msra.mxu0 0.0
        %1030 = vmatpush.msra.mxu0 %v1010
        %1031 = vmatmul.f32.gmra.mxu0 %v1013
        %v1032 = vpop.f32.mrf.mxu0
        %v1033 = vadd.f32 0.0, %v1032
        %1034 = vdwg.mxu0
        %1035 = vrot.lane.b32.xlu0 %v787, 48
        %v1036 = vpop.permute.xlu0 %1035
        %v1039 = vsel %vm852, %v1008, 0
        %1041 = vmatpush.msra.mxu0 0.0
        %1042 = vmatpush.msra.mxu0 0.0
        %1043 = vmatpush.msra.mxu0 0.0
        %1044 = vmatpush.msra.mxu0 0.0
        %1045 = vmatpush.msra.mxu0 0.0
        %1046 = vmatpush.msra.mxu0 0.0
        %1047 = vmatpush.msra.mxu0 0.0
        %1048 = vmatpush.msra.mxu0 0.0
        %1049 = vmatpush.msra.mxu0 0.0
        %1050 = vmatpush.msra.mxu0 0.0
        %1051 = vmatpush.msra.mxu0 0.0
        %1052 = vmatpush.msra.mxu0 0.0
        %1053 = vmatpush.msra.mxu0 0.0
        %1054 = vmatpush.msra.mxu0 0.0
        %1055 = vmatpush.msra.mxu0 0.0
        %1056 = vmatpush.msra.mxu0 %v1036
        %1057 = vmatmul.f32.gmra.mxu0 %v1039
        %v1058 = vpop.f32.mrf.mxu0
        %v1059 = vadd.f32 0.0, %v1058
        %1060 = vdwg.mxu0
        %v1062 = vsel %vm796, %v1033, 0
        %v1065 = vsel %vm796, %v1059, 0
        %1067 = vmatpush.msra.mxu0 0.0
        %1068 = vmatpush.msra.mxu0 0.0
        %1069 = vmatpush.msra.mxu0 0.0
        %1070 = vmatpush.msra.mxu0 0.0
        %1071 = vmatpush.msra.mxu0 0.0
        %1072 = vmatpush.msra.mxu0 0.0
        %1073 = vmatpush.msra.mxu0 0.0
        %1074 = vmatpush.msra.mxu0 0.0
        %1075 = vmatpush.msra.mxu0 0.0
        %1076 = vmatpush.msra.mxu0 0.0
        %1077 = vmatpush.msra.mxu0 0.0
        %1078 = vmatpush.msra.mxu0 0.0
        %1079 = vmatpush.msra.mxu0 0.0
        %1080 = vmatpush.msra.mxu0 0.0
        %1081 = vmatpush.msra.mxu0 %v792
        %1082 = vmatpush.msra.mxu0 %v791
        %1083 = vmatmul.f32.gmra.mxu0 %v1062
        %v1084 = vpop.f32.mrf.mxu0
        %v1085 = vadd.f32 0.0, %v1084
        %1086 = vmatmul.f32.gmra.mxu0 %v1065
        %v1087 = vpop.f32.mrf.mxu0
        %v1088 = vadd.f32 0.0, %v1087
        %1089 = vdwg.mxu0
        %v1091 = vsel %vm796, %v899, 0
        %v1094 = vsel %vm796, %v925, 0
        %1096 = vmatpush.msra.mxu0 0.0
        %1097 = vmatpush.msra.mxu0 0.0
        %1098 = vmatpush.msra.mxu0 0.0
        %1099 = vmatpush.msra.mxu0 0.0
        %1100 = vmatpush.msra.mxu0 0.0
        %1101 = vmatpush.msra.mxu0 0.0
        %1102 = vmatpush.msra.mxu0 0.0
        %1103 = vmatpush.msra.mxu0 0.0
        %1104 = vmatpush.msra.mxu0 0.0
        %1105 = vmatpush.msra.mxu0 0.0
        %1106 = vmatpush.msra.mxu0 0.0
        %1107 = vmatpush.msra.mxu0 0.0
        %1108 = vmatpush.msra.mxu0 0.0
        %1109 = vmatpush.msra.mxu0 0.0
        %1110 = vmatpush.msra.mxu0 %v790
        %1111 = vmatpush.msra.mxu0 %v789
        %1112 = vmatmul.f32.gmra.mxu0 %v1091
        %v1113 = vpop.f32.mrf.mxu0
        %v1114 = vadd.f32 %v1085, %v1113
        %1115 = vmatmul.f32.gmra.mxu0 %v1094
        %v1116 = vpop.f32.mrf.mxu0
        %v1117 = vadd.f32 %v1088, %v1116
        %1118 = vdwg.mxu0
        %v1119 = vld [vmem:[%s601] sm:$0x1]
        %v1121 = vperm.slane %v1119, 0
        %v1123 = vadd.f32 %v1114, %v1121
        %v1124 = vadd.f32 %v1117, %v1121
        %v1125 = vadd.f32 %v748, %v1123
        %v1126 = vadd.f32 %v749, %v1124
        %v1127 = vld [vmem:[%s718] sm:$0x1]
        %v1128 = vld [vmem:[%s610] sm:$0x1]
        %v1129 = vsel %vm759, %v1125, 0.0
        %1130 = vadd.xlane.f32.xlu0 %v1129
        %v1131 = vpop.xlane.xlu0 %1130
        %v1132 = vsel %vm759, %v1126, 0.0
        %1133 = vadd.xlane.f32.xlu0 %v1132
        %v1134 = vpop.xlane.xlu0 %1133
        %v1135 = vrcp.pop 32.0
        %v1136 = vmul.f32 32.0, %v1135
        %v1137 = vsub.f32 1.0, %v1136
        %v1138 = vmul.f32 %v1135, %v1137
        %v1139 = vadd.f32 %v1135, %v1138
        %vm1140 = vweird.f32 %v1135
        %v1141 = vsel %vm1140, %v1135, %v1139
        %v1142 = vmul.f32 %v1131, %v1141
        %v1143 = vmul.f32 %v1134, %v1141
        %v1144 = vsub.f32 %v1125, %v1142
        %v1145 = vsub.f32 %v1126, %v1143
        %v1146 = vmul.f32 %v1144, %v1144
        %v1147 = vmul.f32 %v1145, %v1145
        %v1148 = vsel %vm759, %v1146, 0.0
        %1149 = vadd.xlane.f32.xlu0 %v1148
        %v1150 = vpop.xlane.xlu0 %1149
        %v1151 = vsel %vm759, %v1147, 0.0
        %1152 = vadd.xlane.f32.xlu0 %v1151
        %v1153 = vpop.xlane.xlu0 %1152
        %v1154 = vmul.f32 %v1150, %v1141
        %v1155 = vmul.f32 %v1153, %v1141
        %v1156 = vadd.f32 %v1154, 1e-05
        %v1157 = vadd.f32 %v1155, 1e-05
        %v1158 = vrsqrt.pop %v1156
        %v1159 = vmul.f32 %v1158, %v1156
        %v1160 = vmul.f32 %v1159, %v1158
        %v1161 = vmul.f32 0.5, %v1160
        %v1162 = vsub.f32 1.5, %v1161
        %v1163 = vmul.f32 %v1158, %v1162
        %vm1164 = vweird.f32 %v1156
        %vm1165 = vweird.f32 %v1158
        %vm1166 = vmor %vm1164, %vm1165
        %v1167 = vsel %vm1166, %v1158, %v1163
        %v1168 = vrsqrt.pop %v1157
        %v1169 = vmul.f32 %v1168, %v1157
        %v1170 = vmul.f32 %v1169, %v1168
        %v1171 = vmul.f32 0.5, %v1170
        %v1172 = vsub.f32 1.5, %v1171
        %v1173 = vmul.f32 %v1168, %v1172
        %vm1174 = vweird.f32 %v1157
        %vm1175 = vweird.f32 %v1168
        %vm1176 = vmor %vm1174, %vm1175
        %v1177 = vsel %vm1176, %v1168, %v1173
        %v1178 = vmul.f32 %v1144, %v1167
        %v1179 = vmul.f32 %v1145, %v1177
        %v1181 = vperm.slane %v1127, 0
        %v1183 = vmul.f32 %v1178, %v1181
        %v1184 = vmul.f32 %v1179, %v1181
        %v1186 = vperm.slane %v1128, 0
        %v1188 = vadd.f32 %v1183, %v1186
        %v1189 = vadd.f32 %v1184, %v1186
        %v1190 = vld [vmem:[%s723] sm:$0xff]
        %v1191 = vld [vmem:[%s723 + $0x8] sm:$0xff]
        %v1192 = vld [vmem:[%s723 + $0x10] sm:$0xff]
        %v1193 = vld [vmem:[%s723 + $0x18] sm:$0xff]
        %v1194 = vld [vmem:[%s726] sm:$0x1]
        %v1196 = vperm.slane %v1194, 0
        %v1199 = vsel %vm759, %v1188, 0
        %v1202 = vsel %vm759, %v1189, 0
        %1204 = vmatpush.msra.mxu0 0.0
        %1205 = vmatpush.msra.mxu0 0.0
        %1206 = vmatpush.msra.mxu0 0.0
        %1207 = vmatpush.msra.mxu0 0.0
        %1208 = vmatpush.msra.mxu0 0.0
        %1209 = vmatpush.msra.mxu0 0.0
        %1210 = vmatpush.msra.mxu0 0.0
        %1211 = vmatpush.msra.mxu0 0.0
        %1212 = vmatpush.msra.mxu0 0.0
        %1213 = vmatpush.msra.mxu0 0.0
        %1214 = vmatpush.msra.mxu0 0.0
        %1215 = vmatpush.msra.mxu0 0.0
        %1216 = vmatpush.msra.mxu0 %v1193
        %1217 = vmatpush.msra.mxu0 %v1192
        %1218 = vmatpush.msra.mxu0 %v1191
        %1219 = vmatpush.msra.mxu0 %v1190
        %1220 = vmatmul.f32.gmra.mxu0 %v1199
        %v1221 = vpop.f32.mrf.mxu0
        %v1222 = vadd.f32 %v1196, %v1221
        %1223 = vmatmul.f32.gmra.mxu0 %v1202
        %v1224 = vpop.f32.mrf.mxu0
        %v1225 = vadd.f32 %v1196, %v1224
        %1226 = vdwg.mxu0
        %v1227 = vmax.f32 %v1222, 0.0
        %v1228 = vmax.f32 %v1225, 0.0
        %v1229 = vld [vmem:[%s731] sm:$0xff]
        %v1230 = vld [vmem:[%s731 + $0x8] sm:$0xff]
        %v1231 = vld [vmem:[%s731 + $0x10] sm:$0xff]
        %v1232 = vld [vmem:[%s731 + $0x18] sm:$0xff]
        %v1233 = vld [vmem:[%s731 + $0x20] sm:$0xff]
        %v1234 = vld [vmem:[%s731 + $0x28] sm:$0xff]
        %v1235 = vld [vmem:[%s731 + $0x30] sm:$0xff]
        %v1236 = vld [vmem:[%s731 + $0x38] sm:$0xff]
        %v1237 = vld [vmem:[%s734] sm:$0x1]
        %v1239 = vperm.slane %v1237, 0
        %vm1241 = vcmask 523264
        %v1243 = vsel %vm1241, %v1227, 0
        %v1246 = vsel %vm1241, %v1228, 0
        %1248 = vmatpush.msra.mxu0 0.0
        %1249 = vmatpush.msra.mxu0 0.0
        %1250 = vmatpush.msra.mxu0 0.0
        %1251 = vmatpush.msra.mxu0 0.0
        %1252 = vmatpush.msra.mxu0 0.0
        %1253 = vmatpush.msra.mxu0 0.0
        %1254 = vmatpush.msra.mxu0 0.0
        %1255 = vmatpush.msra.mxu0 0.0
        %1256 = vmatpush.msra.mxu0 %v1236
        %1257 = vmatpush.msra.mxu0 %v1235
        %1258 = vmatpush.msra.mxu0 %v1234
        %1259 = vmatpush.msra.mxu0 %v1233
        %1260 = vmatpush.msra.mxu0 %v1232
        %1261 = vmatpush.msra.mxu0 %v1231
        %1262 = vmatpush.msra.mxu0 %v1230
        %1263 = vmatpush.msra.mxu0 %v1229
        %1264 = vmatmul.f32.gmra.mxu0 %v1243
        %v1265 = vpop.f32.mrf.mxu0
        %v1266 = vadd.f32 %v1239, %v1265
        %1267 = vmatmul.f32.gmra.mxu0 %v1246
        %v1268 = vpop.f32.mrf.mxu0
        %v1269 = vadd.f32 %v1239, %v1268
        %1270 = vdwg.mxu0
        %v1271 = vadd.f32 %v1188, %v1266
        %v1272 = vadd.f32 %v1189, %v1269
        %v1273 = vld [vmem:[%s737] sm:$0x1]
        %v1274 = vld [vmem:[%s619] sm:$0x1]
        %v1275 = vsel %vm759, %v1271, 0.0
        %1276 = vadd.xlane.f32.xlu0 %v1275
        %v1277 = vpop.xlane.xlu0 %1276
        %v1278 = vsel %vm759, %v1272, 0.0
        %1279 = vadd.xlane.f32.xlu0 %v1278
        %v1280 = vpop.xlane.xlu0 %1279
        %v1281 = vmul.f32 %v1277, %v1141
        %v1282 = vmul.f32 %v1280, %v1141
        %v1283 = vsub.f32 %v1271, %v1281
        %v1284 = vsub.f32 %v1272, %v1282
        %v1285 = vmul.f32 %v1283, %v1283
        %v1286 = vmul.f32 %v1284, %v1284
        %v1287 = vsel %vm759, %v1285, 0.0
        %1288 = vadd.xlane.f32.xlu0 %v1287
        %v1289 = vpop.xlane.xlu0 %1288
        %v1290 = vsel %vm759, %v1286, 0.0
        %1291 = vadd.xlane.f32.xlu0 %v1290
        %v1292 = vpop.xlane.xlu0 %1291
        %v1293 = vmul.f32 %v1289, %v1141
        %v1294 = vmul.f32 %v1292, %v1141
        %v1295 = vadd.f32 %v1293, 1e-05
        %v1296 = vadd.f32 %v1294, 1e-05
        %v1297 = vrsqrt.pop %v1295
        %v1298 = vmul.f32 %v1297, %v1295
        %v1299 = vmul.f32 %v1298, %v1297
        %v1300 = vmul.f32 0.5, %v1299
        %v1301 = vsub.f32 1.5, %v1300
        %v1302 = vmul.f32 %v1297, %v1301
        %vm1303 = vweird.f32 %v1295
        %vm1304 = vweird.f32 %v1297
        %vm1305 = vmor %vm1303, %vm1304
        %v1306 = vsel %vm1305, %v1297, %v1302
        %v1307 = vrsqrt.pop %v1296
        %v1308 = vmul.f32 %v1307, %v1296
        %v1309 = vmul.f32 %v1308, %v1307
        %v1310 = vmul.f32 0.5, %v1309
        %v1311 = vsub.f32 1.5, %v1310
        %v1312 = vmul.f32 %v1307, %v1311
        %vm1313 = vweird.f32 %v1296
        %vm1314 = vweird.f32 %v1307
        %vm1315 = vmor %vm1313, %vm1314
        %v1316 = vsel %vm1315, %v1307, %v1312
        %v1317 = vmul.f32 %v1283, %v1306
        %v1318 = vmul.f32 %v1284, %v1316
        %v1320 = vperm.slane %v1273, 0
        %v1322 = vmul.f32 %v1317, %v1320
        %v1323 = vmul.f32 %v1318, %v1320
        %v1325 = vperm.slane %v1274, 0
        %v1327 = vadd.f32 %v1322, %v1325
        %v1328 = vadd.f32 %v1323, %v1325
        %1329 = vst.msk [vmem:[#allocation2] sm:$0xff] %vm759, %v1327
        %1330 = vst.msk [vmem:[#allocation2 + $0x8] sm:$0xff] %vm759, %v1328
        %1331 = vst.msk [vmem:[#allocation11] sm:$0xff] %vm759, %v1327
        %1332 = vst.msk [vmem:[#allocation11 + $0x8] sm:$0xff] %vm759, %v1328
        // Predicated region
        $region101: #{tpu_custom_call.1} parent=75 // pred_check
          %p1333 = pneg %p417
        $region102: #{tpu_custom_call.1} parent=75 // pred_check_branch
          %1335 = sbr.rel (%p1333) target = $region104
        $region103: #{tpu_custom_call.1} parent=75 // pred_region
          %s1336 = smul.u32 2, %s32
          %1338 = vsyncadd [#allocation5], 0
          %s1339 = smul.addr %s1336, 8
          %s1340 = scalar_lea.hbm %s14, %s1339
          %s1341 = sshll.u32 [#allocation11], 4
          %s1342 = int_to_ptr.vmem [resolvable:$true] %s1341
          %s1343 = sshll.u32 %s1340, 4
          %s1344 = int_to_ptr.hbm [resolvable:$true] %s1343
          %1349 = dma.vmem_to_hbm [thread:$0]  %s1342, 256, %s1344, [#allocation5], 128, 128, 8
        $region104: #{tpu_custom_call.1} parent=75 // pred_fallthru
          _
        // Predicated region
        $region105: #{tpu_custom_call.1} parent=75 // pred_check
          %p1350 = pneg %p417
        $region106: #{tpu_custom_call.1} parent=75 // pred_check_branch
          %1352 = sbr.rel (%p1350) target = $region108
        $region107: #{tpu_custom_call.1} parent=75 // pred_region
          %1354 = dma.done [#allocation5], 256
        $region108: #{tpu_custom_call.1} parent=75 // pred_fallthru
          _
      $region76: #{tpu_custom_call.1} parent=5 // pred_fallthru
        _
      %p1355 = scmp.le.s32.totalorder 2, %s23
      // Predicated region
      $region109: #{tpu_custom_call.1} parent=5 // pred_check
        %p1356 = pneg %p1355
      $region110: #{tpu_custom_call.1} parent=5 // pred_check_branch
        %1358 = sbr.rel (%p1356) target = $region112
      $region111: #{tpu_custom_call.1} parent=5 // pred_region
        %s1359 = ssub.s32 %s23, 2
      $region112: #{tpu_custom_call.1} parent=5 // pred_fallthru
        _
    $region6: #{tpu_custom_call.1} parent=1 // loop_footer
      %s27 = sadd.s32 1, %s23
    $region7: #{tpu_custom_call.1} parent=1 // loop_footer_branch
      %22 = sbr.rel target = $region3
    $region8: #{tpu_custom_call.1} parent=1 // loop_exit
      _
    %1360 = vsyncpa [#allocation4], 1
    %s1361 = scalar_lea.sflag [#allocation4], 1
    %1362 = vsyncpa %s1361, 1
    %1363 = vsyncpa [#allocation7], 1
    %1364 = vsyncpa [#allocation5], 1
    %s1365 = scalar_lea.sflag [#allocation5], 1
    %1366 = vsyncpa %s1365, 1

</llo_original>
